<compile_context>
chip_gen: v6e
topology: v6e:2x2x1
jax: 0.10.0
libtpu: 0.0.40
codegen_flags: <defaults>
</compile_context>

<pallas_src>
import functools
import math

import jax
import jax.numpy as jnp
from jax.experimental import pallas as pl
from jax.experimental.pallas import tpu as pltpu


# ----------------------------- Pallas kernels -----------------------------

def _embed_ln_kernel(tok_ref, pos_ref, g_ref, b_ref, o_ref, *, eps):
    # fused: (tok_emb[ids] + pos_emb) -> LayerNorm, one HBM read + one write
    x = tok_ref[...].astype(jnp.float32) + pos_ref[...].astype(jnp.float32)
    mu = jnp.mean(x, axis=-1, keepdims=True)
    var = jnp.mean((x - mu) ** 2, axis=-1, keepdims=True)
    y = (x - mu) * jax.lax.rsqrt(var + eps) * g_ref[...] + b_ref[...]
    o_ref[...] = y.astype(o_ref.dtype)


def _attn_block_kernel(x_ref, mask_ref, wqkv_ref, bqkv_ref, wo_ref, bo_ref,
                       g_ref, b_ref, o_ref, *, n_heads, d_head, eps):
    # one batch element per grid step:
    #   fused QKV projection -> multi-head attention -> output projection
    #   -> residual add -> LayerNorm  (all inside one kernel, no HBM round trip)
    D = n_heads * d_head
    x = x_ref[...]                                             # (S, D) bf16
    qkv = (jnp.dot(x, wqkv_ref[...], preferred_element_type=jnp.float32)
           + bqkv_ref[...]).astype(x.dtype)                    # (S, 3D), q pre-scaled
    bias = mask_ref[0]                                         # (1, S) key-padding bias
    heads = []
    for h in range(n_heads):                                   # static unrolled over heads
        q = qkv[:, h * d_head:(h + 1) * d_head]
        k = qkv[:, D + h * d_head:D + (h + 1) * d_head]
        v = qkv[:, 2 * D + h * d_head:2 * D + (h + 1) * d_head]
        # contract last dims: K consumed untransposed (no XLU transpose)
        s = jax.lax.dot_general(q, k, (((1,), (1,)), ((), ())),
                                preferred_element_type=jnp.float32)
        s = s + bias
        s = s - jnp.max(s, axis=-1, keepdims=True)
        p = jnp.exp(s)
        inv = pl.reciprocal(jnp.sum(p, axis=-1, keepdims=True), approx=True)
        o_h = jnp.dot(p.astype(qkv.dtype), v,
                      preferred_element_type=jnp.float32) * inv
        heads.append(o_h)
    attn = jnp.concatenate(heads, axis=-1)                     # (S, D) f32
    proj = jnp.dot(attn.astype(wo_ref.dtype), wo_ref[...],
                   preferred_element_type=jnp.float32) + bo_ref[...]
    y = proj + x.astype(jnp.float32)                           # residual (post-LN)
    mu = jnp.mean(y, axis=-1, keepdims=True)
    var = jnp.mean((y - mu) ** 2, axis=-1, keepdims=True)
    o_ref[...] = ((y - mu) * jax.lax.rsqrt(var + eps) * g_ref[...]
                  + b_ref[...]).astype(o_ref.dtype)


def _ffn_ln_kernel(x_ref, w1_ref, b1_ref, w2_ref, b2_ref, g_ref, b_ref, o_ref, *, eps):
    # fused: Linear -> ReLU -> Linear -> residual add -> LayerNorm
    x = x_ref[...]
    h = jnp.dot(x, w1_ref[...], preferred_element_type=jnp.float32) + b1_ref[...]
    h = jnp.maximum(h, 0.0)
    f = jnp.dot(h.astype(w2_ref.dtype), w2_ref[...],
                preferred_element_type=jnp.float32) + b2_ref[...]
    y = f + x.astype(jnp.float32)
    mu = jnp.mean(y, axis=-1, keepdims=True)
    var = jnp.mean((y - mu) ** 2, axis=-1, keepdims=True)
    o_ref[...] = ((y - mu) * jax.lax.rsqrt(var + eps) * g_ref[...]
                  + b_ref[...]).astype(o_ref.dtype)


# ----------------------------- Pallas wrappers -----------------------------

_PAR = pltpu.CompilerParams(dimension_semantics=("parallel",))


def _row_tile(M, cap=256):
    # TODO(synk): add K/N tiling + VMEM accumulator for large D/F (weights fit VMEM here).
    return cap if (M >= cap and M % cap == 0) else M


def embed_ln(tok2d, pos2d, g, b, S, eps):
    M, D = tok2d.shape
    B = M // S
    return pl.pallas_call(
        functools.partial(_embed_ln_kernel, eps=eps),
        out_shape=jax.ShapeDtypeStruct((M, D), jnp.bfloat16),
        grid=(B,),
        in_specs=[pl.BlockSpec((S, D), lambda i: (i, 0)),
                  pl.BlockSpec((S, D), lambda i: (0, 0)),
                  pl.BlockSpec((1, D), lambda i: (0, 0)),
                  pl.BlockSpec((1, D), lambda i: (0, 0))],
        out_specs=pl.BlockSpec((S, D), lambda i: (i, 0)),
        compiler_params=_PAR,
    )(tok2d, pos2d, g.reshape(1, D), b.reshape(1, D))


def attn_block(x2d, mask_bias, wqkv, bqkv, wo, bo, ln_g, ln_b, B, S, H, eps):
    M, D = x2d.shape
    Dh = D // H
    N = wqkv.shape[1]
    return pl.pallas_call(
        functools.partial(_attn_block_kernel, n_heads=H, d_head=Dh, eps=eps),
        out_shape=jax.ShapeDtypeStruct((M, D), jnp.bfloat16),
        grid=(B,),
        in_specs=[pl.BlockSpec((S, D), lambda i: (i, 0)),
                  pl.BlockSpec((1, 1, S), lambda i: (i, 0, 0)),
                  pl.BlockSpec((D, N), lambda i: (0, 0)),
                  pl.BlockSpec((1, N), lambda i: (0, 0)),
                  pl.BlockSpec((D, D), lambda i: (0, 0)),
                  pl.BlockSpec((1, D), lambda i: (0, 0)),
                  pl.BlockSpec((1, D), lambda i: (0, 0)),
                  pl.BlockSpec((1, D), lambda i: (0, 0))],
        out_specs=pl.BlockSpec((S, D), lambda i: (i, 0)),
        compiler_params=_PAR,
    )(x2d, mask_bias, wqkv, bqkv.reshape(1, N), wo, bo.reshape(1, D),
      ln_g.reshape(1, D), ln_b.reshape(1, D))


def ffn_ln(x2d, w1, b1, w2, b2, g, b, eps):
    M, D = x2d.shape
    F = w1.shape[1]
    tm = _row_tile(M)
    return pl.pallas_call(
        functools.partial(_ffn_ln_kernel, eps=eps),
        out_shape=jax.ShapeDtypeStruct((M, D), jnp.bfloat16),
        grid=(M // tm,),
        in_specs=[pl.BlockSpec((tm, D), lambda i: (i, 0)),
                  pl.BlockSpec((D, F), lambda i: (0, 0)),
                  pl.BlockSpec((1, F), lambda i: (0, 0)),
                  pl.BlockSpec((F, D), lambda i: (0, 0)),
                  pl.BlockSpec((1, D), lambda i: (0, 0)),
                  pl.BlockSpec((1, D), lambda i: (0, 0)),
                  pl.BlockSpec((1, D), lambda i: (0, 0))],
        out_specs=pl.BlockSpec((tm, D), lambda i: (i, 0)),
        compiler_params=_PAR,
    )(x2d, w1, b1.reshape(1, F), w2, b2.reshape(1, D),
      g.reshape(1, D), b.reshape(1, D))


# ----------------------------- model forward -----------------------------

def encoder_forward(params, input_ids, padding_mask, cfg):
    B, S = input_ids.shape
    D, H = cfg["n_embd"], cfg["n_heads"]
    eps = cfg["norm_eps"]
    M = B * S

    if padding_mask is not None:
        is_pad = (padding_mask == cfg["pad_idx"])          # matches torch forward
    else:
        is_pad = jnp.zeros((B, S), dtype=bool)
    mask_bias = jnp.where(is_pad, -1e9, 0.0).astype(jnp.float32).reshape(B, 1, S)

    # TODO(synk): embedding gather kept as XLA jnp.take (realistic vocab tables don't fit VMEM);
    # pos-add + LayerNorm fused into one Pallas pass.
    tok2d = jnp.take(params["tok_emb"], input_ids, axis=0).reshape(M, D)
    pos2d = params["pos_emb"][:S]
    x2d = embed_ln(tok2d, pos2d, params["emb_ln_g"], params["emb_ln_b"], S, eps)

    for lp in params["layers"]:                            # 2 pallas_calls per layer
        x2d = attn_block(x2d, mask_bias, lp["wqkv"], lp["bqkv"], lp["wo"], lp["bo"],
                         lp["ln1_g"], lp["ln1_b"], B, S, H, eps)
        x2d = ffn_ln(x2d, lp["w1"], lp["b1"], lp["w2"], lp["b2"],
                     lp["ln2_g"], lp["ln2_b"], eps)

    return x2d.reshape(B, S, D).astype(jnp.float32)


# ----------------------------- params init -----------------------------

def init_params(key, cfg):
    D, F, H = cfg["n_embd"], cfg["ffn_dim"], cfg["n_heads"]
    Dh = D // H
    scale = 1.0 / math.sqrt(Dh)
    keys = iter(jax.random.split(key, 8 * cfg["n_layers"] + 8))

    def w(shape):
        return 0.02 * jax.random.normal(next(keys), shape, dtype=jnp.float32)

    tok = w((cfg["n_src_vocab"], D)).at[cfg["pad_idx"]].set(0.0)  # nn.Embedding padding_idx row
    params = {
        "tok_emb": tok.astype(jnp.bfloat16),
        "pos_emb": w((cfg["max_src_positions"], D)).astype(jnp.bfloat16),
        "emb_ln_g": jnp.ones((D,), jnp.float32),
        "emb_ln_b": jnp.zeros((D,), jnp.float32),
        "layers": [],
    }
    for _ in range(cfg["n_layers"]):
        wq, wk, wv = w((D, D)), w((D, D)), w((D, D))
        bq = jnp.zeros((D,), jnp.float32)
        bk = jnp.zeros((D,), jnp.float32)
        bv = jnp.zeros((D,), jnp.float32)
        # fold softmax scale into the Q projection; fuse Q/K/V into one (D, 3D) weight
        wqkv = jnp.concatenate([wq * scale, wk, wv], axis=1).astype(jnp.bfloat16)
        bqkv = jnp.concatenate([bq * scale, bk, bv], axis=0)
        params["layers"].append({
            "wqkv": wqkv, "bqkv": bqkv,
            "wo": w((D, D)).astype(jnp.bfloat16), "bo": jnp.zeros((D,), jnp.float32),
            "ln1_g": jnp.ones((D,), jnp.float32), "ln1_b": jnp.zeros((D,), jnp.float32),
            "w1": w((D, F)).astype(jnp.bfloat16), "b1": jnp.zeros((F,), jnp.float32),
            "w2": w((F, D)).astype(jnp.bfloat16), "b2": jnp.zeros((D,), jnp.float32),
            "ln2_g": jnp.ones((D,), jnp.float32), "ln2_b": jnp.zeros((D,), jnp.float32),
        })
    return params


# ----------------------------- main -----------------------------

if __name__ == "__main__":
    cfg = dict(
        n_src_vocab=50,
        n_embd=32,
        n_heads=4,
        n_layers=2,
        ffn_dim=64,
        max_src_positions=32,
        pad_idx=0,
        norm_eps=1e-5,
        dropout=0.0,
    )
    B, S = 2, 8

    root = jax.random.PRNGKey(0)
    k_ids, k_par = jax.random.split(root)
    input_ids = jax.random.randint(k_ids, (B, S), 1, cfg["n_src_vocab"], dtype=jnp.int32)
    input_ids = input_ids.at[:, -2:].set(cfg["pad_idx"])           # trailing padding
    padding_mask = input_ids                                        # compared to pad_idx inside

    params = init_params(k_par, cfg)
    fwd = jax.jit(lambda ids, mask: encoder_forward(params, ids, mask, cfg))
    out = jax.block_until_ready(fwd(input_ids, padding_mask))
    assert out.shape == (B, S, cfg["n_embd"]) and bool(jnp.all(jnp.isfinite(out)))
    print("KERNEL_OK")
</pallas_src>

<mosaic_0001>
module attributes {stable_mosaic.version = 11 : i64} {
  func.func @_embed_ln_kernel(%arg0: i32, %arg1: memref<8x32xbf16, #tpu.memory_space<vmem>>, %arg2: memref<8x32xbf16, #tpu.memory_space<vmem>>, %arg3: memref<1x32xf32, #tpu.memory_space<vmem>>, %arg4: memref<1x32xf32, #tpu.memory_space<vmem>>, %arg5: memref<8x32xbf16, #tpu.memory_space<vmem>>) attributes {dimension_semantics = [#tpu.dimension_semantics<parallel>], iteration_bounds = array<i64: 2>, scalar_prefetch = 0 : i64, scratch_operands = 0 : i64, tpu.core_type = #tpu.core_type<tc>, window_params = [{transform_indices = @transform_0, window_bounds = array<i64: 8, 32>}, {pipeline_mode = #tpu.pipeline_mode<synchronous>, transform_indices = @transform_1, window_bounds = array<i64: 8, 32>}, {pipeline_mode = #tpu.pipeline_mode<synchronous>, transform_indices = @transform_2, window_bounds = array<i64: 1, 32>}, {pipeline_mode = #tpu.pipeline_mode<synchronous>, transform_indices = @transform_3, window_bounds = array<i64: 1, 32>}, {transform_indices = @transform_4, window_bounds = array<i64: 8, 32>}]} {
    %c0 = arith.constant 0 : index
    %c0_0 = arith.constant 0 : index
    %0 = vector.load %arg1[%c0, %c0_0] : memref<8x32xbf16, #tpu.memory_space<vmem>>, vector<8x32xbf16>
    %1 = arith.extf %0 : vector<8x32xbf16> to vector<8x32xf32>
    %c0_1 = arith.constant 0 : index
    %c0_2 = arith.constant 0 : index
    %2 = vector.load %arg2[%c0_1, %c0_2] : memref<8x32xbf16, #tpu.memory_space<vmem>>, vector<8x32xbf16>
    %3 = arith.extf %2 : vector<8x32xbf16> to vector<8x32xf32>
    %4 = arith.addf %1, %3 : vector<8x32xf32>
    %cst = arith.constant dense<0.000000e+00> : vector<8xf32>
    %5 = vector.multi_reduction <add>, %4, %cst [1] : vector<8x32xf32> to vector<8xf32>
    %6 = vector.shape_cast %5 : vector<8xf32> to vector<8x1xf32>
    %cst_3 = arith.constant 3.200000e+01 : f32
    %7 = vector.broadcast %cst_3 : f32 to vector<8x1xf32>
    %8 = arith.divf %6, %7 : vector<8x1xf32>
    %9 = vector.broadcast %8 : vector<8x1xf32> to vector<8x32xf32>
    %10 = arith.subf %4, %9 : vector<8x32xf32>
    %11 = arith.mulf %10, %10 : vector<8x32xf32>
    %cst_4 = arith.constant dense<0.000000e+00> : vector<8xf32>
    %12 = vector.multi_reduction <add>, %11, %cst_4 [1] : vector<8x32xf32> to vector<8xf32>
    %13 = vector.shape_cast %12 : vector<8xf32> to vector<8x1xf32>
    %cst_5 = arith.constant 3.200000e+01 : f32
    %14 = vector.broadcast %cst_5 : f32 to vector<8x1xf32>
    %15 = arith.divf %13, %14 : vector<8x1xf32>
    %16 = vector.broadcast %8 : vector<8x1xf32> to vector<8x32xf32>
    %17 = arith.subf %4, %16 : vector<8x32xf32>
    %cst_6 = arith.constant 9.99999974E-6 : f32
    %18 = vector.broadcast %cst_6 : f32 to vector<8x1xf32>
    %19 = arith.addf %15, %18 : vector<8x1xf32>
    %20 = math.rsqrt %19 : vector<8x1xf32>
    %21 = vector.broadcast %20 : vector<8x1xf32> to vector<8x32xf32>
    %22 = arith.mulf %17, %21 : vector<8x32xf32>
    %c0_7 = arith.constant 0 : index
    %c0_8 = arith.constant 0 : index
    %23 = vector.load %arg3[%c0_7, %c0_8] : memref<1x32xf32, #tpu.memory_space<vmem>>, vector<1x32xf32>
    %24 = vector.broadcast %23 : vector<1x32xf32> to vector<8x32xf32>
    %25 = arith.mulf %22, %24 : vector<8x32xf32>
    %c0_9 = arith.constant 0 : index
    %c0_10 = arith.constant 0 : index
    %26 = vector.load %arg4[%c0_9, %c0_10] : memref<1x32xf32, #tpu.memory_space<vmem>>, vector<1x32xf32>
    %27 = vector.broadcast %26 : vector<1x32xf32> to vector<8x32xf32>
    %28 = arith.addf %25, %27 : vector<8x32xf32>
    %29 = arith.truncf %28 : vector<8x32xf32> to vector<8x32xbf16>
    %c0_11 = arith.constant 0 : index
    %c0_12 = arith.constant 0 : index
    %30 = vector.load %arg5[%c0_11, %c0_12] : memref<8x32xbf16, #tpu.memory_space<vmem>>, vector<8x32xbf16>
    tpu.vector_store %arg5[%c0_11, %c0_12], %29 {strides = array<i32>} : memref<8x32xbf16, #tpu.memory_space<vmem>>, vector<8x32xbf16>,
    return
  }
  func.func @transform_0(%arg0: i32) -> (i32, i32) {
    %c0_i32 = arith.constant 0 : i32
    %c0_i32_0 = arith.constant 0 : i32
    return %arg0, %c0_i32 : i32, i32
  }
  func.func @transform_1(%arg0: i32) -> (i32, i32) {
    %c0_i32 = arith.constant 0 : i32
    %c0_i32_0 = arith.constant 0 : i32
    %c0_i32_1 = arith.constant 0 : i32
    return %c0_i32, %c0_i32_0 : i32, i32
  }
  func.func @transform_2(%arg0: i32) -> (i32, i32) {
    %c0_i32 = arith.constant 0 : i32
    %c0_i32_0 = arith.constant 0 : i32
    %c0_i32_1 = arith.constant 0 : i32
    return %c0_i32, %c0_i32_0 : i32, i32
  }
  func.func @transform_3(%arg0: i32) -> (i32, i32) {
    %c0_i32 = arith.constant 0 : i32
    %c0_i32_0 = arith.constant 0 : i32
    %c0_i32_1 = arith.constant 0 : i32
    return %c0_i32, %c0_i32_0 : i32, i32
  }
  func.func @transform_4(%arg0: i32) -> (i32, i32) {
    %c0_i32 = arith.constant 0 : i32
    %c0_i32_0 = arith.constant 0 : i32
    return %arg0, %c0_i32 : i32, i32
  }
}

module attributes {stable_mosaic.version = 11 : i64} {
  func.func @_ffn_ln_kernel(%arg0: i32, %arg1: memref<16x32xbf16, #tpu.memory_space<vmem>>, %arg2: memref<32x64xbf16, #tpu.memory_space<vmem>>, %arg3: memref<1x64xf32, #tpu.memory_space<vmem>>, %arg4: memref<64x32xbf16, #tpu.memory_space<vmem>>, %arg5: memref<1x32xf32, #tpu.memory_space<vmem>>, %arg6: memref<1x32xf32, #tpu.memory_space<vmem>>, %arg7: memref<1x32xf32, #tpu.memory_space<vmem>>, %arg8: memref<16x32xbf16, #tpu.memory_space<vmem>>) attributes {dimension_semantics = [#tpu.dimension_semantics<parallel>], iteration_bounds = array<i64: 1>, scalar_prefetch = 0 : i64, scratch_operands = 0 : i64, tpu.core_type = #tpu.core_type<tc>, window_params = [{transform_indices = @transform_0, window_bounds = array<i64: 16, 32>}, {pipeline_mode = #tpu.pipeline_mode<synchronous>, transform_indices = @transform_1, window_bounds = array<i64: 32, 64>}, {pipeline_mode = #tpu.pipeline_mode<synchronous>, transform_indices = @transform_2, window_bounds = array<i64: 1, 64>}, {pipeline_mode = #tpu.pipeline_mode<synchronous>, transform_indices = @transform_3, window_bounds = array<i64: 64, 32>}, {pipeline_mode = #tpu.pipeline_mode<synchronous>, transform_indices = @transform_4, window_bounds = array<i64: 1, 32>}, {pipeline_mode = #tpu.pipeline_mode<synchronous>, transform_indices = @transform_5, window_bounds = array<i64: 1, 32>}, {pipeline_mode = #tpu.pipeline_mode<synchronous>, transform_indices = @transform_6, window_bounds = array<i64: 1, 32>}, {transform_indices = @transform_7, window_bounds = array<i64: 16, 32>}]} {
    %c0 = arith.constant 0 : index
    %c0_0 = arith.constant 0 : index
    %0 = vector.load %arg1[%c0, %c0_0] : memref<16x32xbf16, #tpu.memory_space<vmem>>, vector<16x32xbf16>
    %c0_1 = arith.constant 0 : index
    %c0_2 = arith.constant 0 : index
    %1 = vector.load %arg2[%c0_1, %c0_2] : memref<32x64xbf16, #tpu.memory_space<vmem>>, vector<32x64xbf16>
    %cst = arith.constant dense<0.000000e+00> : vector<16x64xf32>
    %2 = tpu.matmul %0, %1, %cst {dimension_numbers = #tpu.dot_dimension_numbers<[1], [0], [0], [1], [0, 0, 1, 1], [], []>} : vector<16x32xbf16>, vector<32x64xbf16>, vector<16x64xf32> -> vector<16x64xf32>
    %c0_3 = arith.constant 0 : index
    %c0_4 = arith.constant 0 : index
    %3 = vector.load %arg3[%c0_3, %c0_4] : memref<1x64xf32, #tpu.memory_space<vmem>>, vector<1x64xf32>
    %4 = vector.broadcast %3 : vector<1x64xf32> to vector<16x64xf32>
    %5 = arith.addf %2, %4 : vector<16x64xf32>
    %cst_5 = arith.constant 0.000000e+00 : f32
    %6 = vector.broadcast %cst_5 : f32 to vector<16x64xf32>
    %7 = arith.maximumf %5, %6 : vector<16x64xf32>
    %8 = arith.truncf %7 : vector<16x64xf32> to vector<16x64xbf16>
    %c0_6 = arith.constant 0 : index
    %c0_7 = arith.constant 0 : index
    %9 = vector.load %arg4[%c0_6, %c0_7] : memref<64x32xbf16, #tpu.memory_space<vmem>>, vector<64x32xbf16>
    %cst_8 = arith.constant dense<0.000000e+00> : vector<16x32xf32>
    %10 = tpu.matmul %8, %9, %cst_8 {dimension_numbers = #tpu.dot_dimension_numbers<[1], [0], [0], [1], [0, 0, 1, 1], [], []>} : vector<16x64xbf16>, vector<64x32xbf16>, vector<16x32xf32> -> vector<16x32xf32>
    %c0_9 = arith.constant 0 : index
    %c0_10 = arith.constant 0 : index
    %11 = vector.load %arg5[%c0_9, %c0_10] : memref<1x32xf32, #tpu.memory_space<vmem>>, vector<1x32xf32>
    %12 = vector.broadcast %11 : vector<1x32xf32> to vector<16x32xf32>
    %13 = arith.addf %10, %12 : vector<16x32xf32>
    %14 = arith.extf %0 : vector<16x32xbf16> to vector<16x32xf32>
    %15 = arith.addf %13, %14 : vector<16x32xf32>
    %cst_11 = arith.constant dense<0.000000e+00> : vector<16xf32>
    %16 = vector.multi_reduction <add>, %15, %cst_11 [1] : vector<16x32xf32> to vector<16xf32>
    %17 = vector.shape_cast %16 : vector<16xf32> to vector<16x1xf32>
    %cst_12 = arith.constant 3.200000e+01 : f32
    %18 = vector.broadcast %cst_12 : f32 to vector<16x1xf32>
    %19 = arith.divf %17, %18 : vector<16x1xf32>
    %20 = vector.broadcast %19 : vector<16x1xf32> to vector<16x32xf32>
    %21 = arith.subf %15, %20 : vector<16x32xf32>
    %22 = arith.mulf %21, %21 : vector<16x32xf32>
    %cst_13 = arith.constant dense<0.000000e+00> : vector<16xf32>
    %23 = vector.multi_reduction <add>, %22, %cst_13 [1] : vector<16x32xf32> to vector<16xf32>
    %24 = vector.shape_cast %23 : vector<16xf32> to vector<16x1xf32>
    %cst_14 = arith.constant 3.200000e+01 : f32
    %25 = vector.broadcast %cst_14 : f32 to vector<16x1xf32>
    %26 = arith.divf %24, %25 : vector<16x1xf32>
    %27 = vector.broadcast %19 : vector<16x1xf32> to vector<16x32xf32>
    %28 = arith.subf %15, %27 : vector<16x32xf32>
    %cst_15 = arith.constant 9.99999974E-6 : f32
    %29 = vector.broadcast %cst_15 : f32 to vector<16x1xf32>
    %30 = arith.addf %26, %29 : vector<16x1xf32>
    %31 = math.rsqrt %30 : vector<16x1xf32>
    %32 = vector.broadcast %31 : vector<16x1xf32> to vector<16x32xf32>
    %33 = arith.mulf %28, %32 : vector<16x32xf32>
    %c0_16 = arith.constant 0 : index
    %c0_17 = arith.constant 0 : index
    %34 = vector.load %arg6[%c0_16, %c0_17] : memref<1x32xf32, #tpu.memory_space<vmem>>, vector<1x32xf32>
    %35 = vector.broadcast %34 : vector<1x32xf32> to vector<16x32xf32>
    %36 = arith.mulf %33, %35 : vector<16x32xf32>
    %c0_18 = arith.constant 0 : index
    %c0_19 = arith.constant 0 : index
    %37 = vector.load %arg7[%c0_18, %c0_19] : memref<1x32xf32, #tpu.memory_space<vmem>>, vector<1x32xf32>
    %38 = vector.broadcast %37 : vector<1x32xf32> to vector<16x32xf32>
    %39 = arith.addf %36, %38 : vector<16x32xf32>
    %40 = arith.truncf %39 : vector<16x32xf32> to vector<16x32xbf16>
    %c0_20 = arith.constant 0 : index
    %c0_21 = arith.constant 0 : index
    %41 = vector.load %arg8[%c0_20, %c0_21] : memref<16x32xbf16, #tpu.memory_space<vmem>>, vector<16x32xbf16>
    tpu.vector_store %arg8[%c0_20, %c0_21], %40 {strides = array<i32>} : memref<16x32xbf16, #tpu.memory_space<vmem>>, vector<16x32xbf16>,
    return
  }
  func.func @transform_0(%arg0: i32) -> (i32, i32) {
    %c0_i32 = arith.constant 0 : i32
    %c0_i32_0 = arith.constant 0 : i32
    return %arg0, %c0_i32 : i32, i32
  }
  func.func @transform_1(%arg0: i32) -> (i32, i32) {
    %c0_i32 = arith.constant 0 : i32
    %c0_i32_0 = arith.constant 0 : i32
    %c0_i32_1 = arith.constant 0 : i32
    return %c0_i32, %c0_i32_0 : i32, i32
  }
  func.func @transform_2(%arg0: i32) -> (i32, i32) {
    %c0_i32 = arith.constant 0 : i32
    %c0_i32_0 = arith.constant 0 : i32
    %c0_i32_1 = arith.constant 0 : i32
    return %c0_i32, %c0_i32_0 : i32, i32
  }
  func.func @transform_3(%arg0: i32) -> (i32, i32) {
    %c0_i32 = arith.constant 0 : i32
    %c0_i32_0 = arith.constant 0 : i32
    %c0_i32_1 = arith.constant 0 : i32
    return %c0_i32, %c0_i32_0 : i32, i32
  }
  func.func @transform_4(%arg0: i32) -> (i32, i32) {
    %c0_i32 = arith.constant 0 : i32
    %c0_i32_0 = arith.constant 0 : i32
    %c0_i32_1 = arith.constant 0 : i32
    return %c0_i32, %c0_i32_0 : i32, i32
  }
  func.func @transform_5(%arg0: i32) -> (i32, i32) {
    %c0_i32 = arith.constant 0 : i32
    %c0_i32_0 = arith.constant 0 : i32
    %c0_i32_1 = arith.constant 0 : i32
    return %c0_i32, %c0_i32_0 : i32, i32
  }
  func.func @transform_6(%arg0: i32) -> (i32, i32) {
    %c0_i32 = arith.constant 0 : i32
    %c0_i32_0 = arith.constant 0 : i32
    %c0_i32_1 = arith.constant 0 : i32
    return %c0_i32, %c0_i32_0 : i32, i32
  }
  func.func @transform_7(%arg0: i32) -> (i32, i32) {
    %c0_i32 = arith.constant 0 : i32
    %c0_i32_0 = arith.constant 0 : i32
    return %arg0, %c0_i32 : i32, i32
  }
}

module attributes {stable_mosaic.version = 11 : i64} {
  func.func @_attn_block_kernel(%arg0: i32, %arg1: memref<8x32xbf16, #tpu.memory_space<vmem>>, %arg2: memref<1x1x8xf32, #tpu.memory_space<vmem>>, %arg3: memref<32x96xbf16, #tpu.memory_space<vmem>>, %arg4: memref<1x96xf32, #tpu.memory_space<vmem>>, %arg5: memref<32x32xbf16, #tpu.memory_space<vmem>>, %arg6: memref<1x32xf32, #tpu.memory_space<vmem>>, %arg7: memref<1x32xf32, #tpu.memory_space<vmem>>, %arg8: memref<1x32xf32, #tpu.memory_space<vmem>>, %arg9: memref<8x32xbf16, #tpu.memory_space<vmem>>) attributes {dimension_semantics = [#tpu.dimension_semantics<parallel>], iteration_bounds = array<i64: 2>, scalar_prefetch = 0 : i64, scratch_operands = 0 : i64, tpu.core_type = #tpu.core_type<tc>, window_params = [{transform_indices = @transform_0, window_bounds = array<i64: 8, 32>}, {transform_indices = @transform_1, window_bounds = array<i64: 1, 1, 8>}, {pipeline_mode = #tpu.pipeline_mode<synchronous>, transform_indices = @transform_2, window_bounds = array<i64: 32, 96>}, {pipeline_mode = #tpu.pipeline_mode<synchronous>, transform_indices = @transform_3, window_bounds = array<i64: 1, 96>}, {pipeline_mode = #tpu.pipeline_mode<synchronous>, transform_indices = @transform_4, window_bounds = array<i64: 32, 32>}, {pipeline_mode = #tpu.pipeline_mode<synchronous>, transform_indices = @transform_5, window_bounds = array<i64: 1, 32>}, {pipeline_mode = #tpu.pipeline_mode<synchronous>, transform_indices = @transform_6, window_bounds = array<i64: 1, 32>}, {pipeline_mode = #tpu.pipeline_mode<synchronous>, transform_indices = @transform_7, window_bounds = array<i64: 1, 32>}, {transform_indices = @transform_8, window_bounds = array<i64: 8, 32>}]} {
    %c0 = arith.constant 0 : index
    %c0_0 = arith.constant 0 : index
    %0 = vector.load %arg1[%c0, %c0_0] : memref<8x32xbf16, #tpu.memory_space<vmem>>, vector<8x32xbf16>
    %c0_1 = arith.constant 0 : index
    %c0_2 = arith.constant 0 : index
    %1 = vector.load %arg3[%c0_1, %c0_2] : memref<32x96xbf16, #tpu.memory_space<vmem>>, vector<32x96xbf16>
    %cst = arith.constant dense<0.000000e+00> : vector<8x96xf32>
    %2 = tpu.matmul %0, %1, %cst {dimension_numbers = #tpu.dot_dimension_numbers<[1], [0], [0], [1], [0, 0, 1, 1], [], []>} : vector<8x32xbf16>, vector<32x96xbf16>, vector<8x96xf32> -> vector<8x96xf32>
    %c0_3 = arith.constant 0 : index
    %c0_4 = arith.constant 0 : index
    %3 = vector.load %arg4[%c0_3, %c0_4] : memref<1x96xf32, #tpu.memory_space<vmem>>, vector<1x96xf32>
    %4 = vector.broadcast %3 : vector<1x96xf32> to vector<8x96xf32>
    %5 = arith.addf %2, %4 : vector<8x96xf32>
    %6 = arith.truncf %5 : vector<8x96xf32> to vector<8x96xbf16>
    %c0_5 = arith.constant 0 : index
    %c0_6 = arith.constant 0 : index
    %c0_7 = arith.constant 0 : index
    %7 = vector.load %arg2[%c0_5, %c0_6, %c0_7] : memref<1x1x8xf32, #tpu.memory_space<vmem>>, vector<1x1x8xf32>
    %8 = vector.shape_cast %7 : vector<1x1x8xf32> to vector<1x8xf32>
    %9 = vector.extract_strided_slice %6 {offsets = [0, 0], sizes = [8, 8], strides = [1, 1]} : vector<8x96xbf16> to vector<8x8xbf16>
    %10 = vector.extract_strided_slice %6 {offsets = [0, 32], sizes = [8, 8], strides = [1, 1]} : vector<8x96xbf16> to vector<8x8xbf16>
    %11 = vector.extract_strided_slice %6 {offsets = [0, 64], sizes = [8, 8], strides = [1, 1]} : vector<8x96xbf16> to vector<8x8xbf16>
    %cst_8 = arith.constant dense<0.000000e+00> : vector<8x8xf32>
    %12 = tpu.matmul %9, %10, %cst_8 {dimension_numbers = #tpu.dot_dimension_numbers<[1], [1], [0], [0], [0, 0, 1, 0], [], []>} : vector<8x8xbf16>, vector<8x8xbf16>, vector<8x8xf32> -> vector<8x8xf32>
    %13 = vector.broadcast %8 : vector<1x8xf32> to vector<8x8xf32>
    %14 = arith.addf %12, %13 : vector<8x8xf32>
    %cst_9 = arith.constant dense<0xFF800000> : vector<8xf32>
    %15 = vector.multi_reduction <maximumf>, %14, %cst_9 [1] : vector<8x8xf32> to vector<8xf32>
    %16 = vector.shape_cast %15 : vector<8xf32> to vector<8x1xf32>
    %17 = vector.broadcast %16 : vector<8x1xf32> to vector<8x8xf32>
    %18 = arith.subf %14, %17 : vector<8x8xf32>
    %19 = math.exp %18 : vector<8x8xf32>
    %cst_10 = arith.constant dense<0.000000e+00> : vector<8xf32>
    %20 = vector.multi_reduction <add>, %19, %cst_10 [1] : vector<8x8xf32> to vector<8xf32>
    %21 = vector.shape_cast %20 : vector<8xf32> to vector<8x1xf32>
    %22 = tpu.reciprocal %21 {approx = true} : vector<8x1xf32> -> vector<8x1xf32>
    %23 = arith.truncf %19 : vector<8x8xf32> to vector<8x8xbf16>
    %cst_11 = arith.constant dense<0.000000e+00> : vector<8x8xf32>
    %24 = tpu.matmul %23, %11, %cst_11 {dimension_numbers = #tpu.dot_dimension_numbers<[1], [0], [0], [1], [0, 0, 1, 1], [], []>} : vector<8x8xbf16>, vector<8x8xbf16>, vector<8x8xf32> -> vector<8x8xf32>
    %25 = vector.broadcast %22 : vector<8x1xf32> to vector<8x8xf32>
    %26 = arith.mulf %24, %25 : vector<8x8xf32>
    %27 = vector.extract_strided_slice %6 {offsets = [0, 8], sizes = [8, 8], strides = [1, 1]} : vector<8x96xbf16> to vector<8x8xbf16>
    %28 = vector.extract_strided_slice %6 {offsets = [0, 40], sizes = [8, 8], strides = [1, 1]} : vector<8x96xbf16> to vector<8x8xbf16>
    %29 = vector.extract_strided_slice %6 {offsets = [0, 72], sizes = [8, 8], strides = [1, 1]} : vector<8x96xbf16> to vector<8x8xbf16>
    %cst_12 = arith.constant dense<0.000000e+00> : vector<8x8xf32>
    %30 = tpu.matmul %27, %28, %cst_12 {dimension_numbers = #tpu.dot_dimension_numbers<[1], [1], [0], [0], [0, 0, 1, 0], [], []>} : vector<8x8xbf16>, vector<8x8xbf16>, vector<8x8xf32> -> vector<8x8xf32>
    %31 = vector.broadcast %8 : vector<1x8xf32> to vector<8x8xf32>
    %32 = arith.addf %30, %31 : vector<8x8xf32>
    %cst_13 = arith.constant dense<0xFF800000> : vector<8xf32>
    %33 = vector.multi_reduction <maximumf>, %32, %cst_13 [1] : vector<8x8xf32> to vector<8xf32>
    %34 = vector.shape_cast %33 : vector<8xf32> to vector<8x1xf32>
    %35 = vector.broadcast %34 : vector<8x1xf32> to vector<8x8xf32>
    %36 = arith.subf %32, %35 : vector<8x8xf32>
    %37 = math.exp %36 : vector<8x8xf32>
    %cst_14 = arith.constant dense<0.000000e+00> : vector<8xf32>
    %38 = vector.multi_reduction <add>, %37, %cst_14 [1] : vector<8x8xf32> to vector<8xf32>
    %39 = vector.shape_cast %38 : vector<8xf32> to vector<8x1xf32>
    %40 = tpu.reciprocal %39 {approx = true} : vector<8x1xf32> -> vector<8x1xf32>
    %41 = arith.truncf %37 : vector<8x8xf32> to vector<8x8xbf16>
    %cst_15 = arith.constant dense<0.000000e+00> : vector<8x8xf32>
    %42 = tpu.matmul %41, %29, %cst_15 {dimension_numbers = #tpu.dot_dimension_numbers<[1], [0], [0], [1], [0, 0, 1, 1], [], []>} : vector<8x8xbf16>, vector<8x8xbf16>, vector<8x8xf32> -> vector<8x8xf32>
    %43 = vector.broadcast %40 : vector<8x1xf32> to vector<8x8xf32>
    %44 = arith.mulf %42, %43 : vector<8x8xf32>
    %45 = vector.extract_strided_slice %6 {offsets = [0, 16], sizes = [8, 8], strides = [1, 1]} : vector<8x96xbf16> to vector<8x8xbf16>
    %46 = vector.extract_strided_slice %6 {offsets = [0, 48], sizes = [8, 8], strides = [1, 1]} : vector<8x96xbf16> to vector<8x8xbf16>
    %47 = vector.extract_strided_slice %6 {offsets = [0, 80], sizes = [8, 8], strides = [1, 1]} : vector<8x96xbf16> to vector<8x8xbf16>
    %cst_16 = arith.constant dense<0.000000e+00> : vector<8x8xf32>
    %48 = tpu.matmul %45, %46, %cst_16 {dimension_numbers = #tpu.dot_dimension_numbers<[1], [1], [0], [0], [0, 0, 1, 0], [], []>} : vector<8x8xbf16>, vector<8x8xbf16>, vector<8x8xf32> -> vector<8x8xf32>
    %49 = vector.broadcast %8 : vector<1x8xf32> to vector<8x8xf32>
    %50 = arith.addf %48, %49 : vector<8x8xf32>
    %cst_17 = arith.constant dense<0xFF800000> : vector<8xf32>
    %51 = vector.multi_reduction <maximumf>, %50, %cst_17 [1] : vector<8x8xf32> to vector<8xf32>
    %52 = vector.shape_cast %51 : vector<8xf32> to vector<8x1xf32>
    %53 = vector.broadcast %52 : vector<8x1xf32> to vector<8x8xf32>
    %54 = arith.subf %50, %53 : vector<8x8xf32>
    %55 = math.exp %54 : vector<8x8xf32>
    %cst_18 = arith.constant dense<0.000000e+00> : vector<8xf32>
    %56 = vector.multi_reduction <add>, %55, %cst_18 [1] : vector<8x8xf32> to vector<8xf32>
    %57 = vector.shape_cast %56 : vector<8xf32> to vector<8x1xf32>
    %58 = tpu.reciprocal %57 {approx = true} : vector<8x1xf32> -> vector<8x1xf32>
    %59 = arith.truncf %55 : vector<8x8xf32> to vector<8x8xbf16>
    %cst_19 = arith.constant dense<0.000000e+00> : vector<8x8xf32>
    %60 = tpu.matmul %59, %47, %cst_19 {dimension_numbers = #tpu.dot_dimension_numbers<[1], [0], [0], [1], [0, 0, 1, 1], [], []>} : vector<8x8xbf16>, vector<8x8xbf16>, vector<8x8xf32> -> vector<8x8xf32>
    %61 = vector.broadcast %58 : vector<8x1xf32> to vector<8x8xf32>
    %62 = arith.mulf %60, %61 : vector<8x8xf32>
    %63 = vector.extract_strided_slice %6 {offsets = [0, 24], sizes = [8, 8], strides = [1, 1]} : vector<8x96xbf16> to vector<8x8xbf16>
    %64 = vector.extract_strided_slice %6 {offsets = [0, 56], sizes = [8, 8], strides = [1, 1]} : vector<8x96xbf16> to vector<8x8xbf16>
    %65 = vector.extract_strided_slice %6 {offsets = [0, 88], sizes = [8, 8], strides = [1, 1]} : vector<8x96xbf16> to vector<8x8xbf16>
    %cst_20 = arith.constant dense<0.000000e+00> : vector<8x8xf32>
    %66 = tpu.matmul %63, %64, %cst_20 {dimension_numbers = #tpu.dot_dimension_numbers<[1], [1], [0], [0], [0, 0, 1, 0], [], []>} : vector<8x8xbf16>, vector<8x8xbf16>, vector<8x8xf32> -> vector<8x8xf32>
    %67 = vector.broadcast %8 : vector<1x8xf32> to vector<8x8xf32>
    %68 = arith.addf %66, %67 : vector<8x8xf32>
    %cst_21 = arith.constant dense<0xFF800000> : vector<8xf32>
    %69 = vector.multi_reduction <maximumf>, %68, %cst_21 [1] : vector<8x8xf32> to vector<8xf32>
    %70 = vector.shape_cast %69 : vector<8xf32> to vector<8x1xf32>
    %71 = vector.broadcast %70 : vector<8x1xf32> to vector<8x8xf32>
    %72 = arith.subf %68, %71 : vector<8x8xf32>
    %73 = math.exp %72 : vector<8x8xf32>
    %cst_22 = arith.constant dense<0.000000e+00> : vector<8xf32>
    %74 = vector.multi_reduction <add>, %73, %cst_22 [1] : vector<8x8xf32> to vector<8xf32>
    %75 = vector.shape_cast %74 : vector<8xf32> to vector<8x1xf32>
    %76 = tpu.reciprocal %75 {approx = true} : vector<8x1xf32> -> vector<8x1xf32>
    %77 = arith.truncf %73 : vector<8x8xf32> to vector<8x8xbf16>
    %cst_23 = arith.constant dense<0.000000e+00> : vector<8x8xf32>
    %78 = tpu.matmul %77, %65, %cst_23 {dimension_numbers = #tpu.dot_dimension_numbers<[1], [0], [0], [1], [0, 0, 1, 1], [], []>} : vector<8x8xbf16>, vector<8x8xbf16>, vector<8x8xf32> -> vector<8x8xf32>
    %79 = vector.broadcast %76 : vector<8x1xf32> to vector<8x8xf32>
    %80 = arith.mulf %78, %79 : vector<8x8xf32>
    %81 = tpu.concatenate %26, %44, %62, %80 in 1 : vector<8x8xf32>, vector<8x8xf32>, vector<8x8xf32>, vector<8x8xf32> -> vector<8x32xf32>
    %82 = arith.truncf %81 : vector<8x32xf32> to vector<8x32xbf16>
    %c0_24 = arith.constant 0 : index
    %c0_25 = arith.constant 0 : index
    %83 = vector.load %arg5[%c0_24, %c0_25] : memref<32x32xbf16, #tpu.memory_space<vmem>>, vector<32x32xbf16>
    %cst_26 = arith.constant dense<0.000000e+00> : vector<8x32xf32>
    %84 = tpu.matmul %82, %83, %cst_26 {dimension_numbers = #tpu.dot_dimension_numbers<[1], [0], [0], [1], [0, 0, 1, 1], [], []>} : vector<8x32xbf16>, vector<32x32xbf16>, vector<8x32xf32> -> vector<8x32xf32>
    %c0_27 = arith.constant 0 : index
    %c0_28 = arith.constant 0 : index
    %85 = vector.load %arg6[%c0_27, %c0_28] : memref<1x32xf32, #tpu.memory_space<vmem>>, vector<1x32xf32>
    %86 = vector.broadcast %85 : vector<1x32xf32> to vector<8x32xf32>
    %87 = arith.addf %84, %86 : vector<8x32xf32>
    %88 = arith.extf %0 : vector<8x32xbf16> to vector<8x32xf32>
    %89 = arith.addf %87, %88 : vector<8x32xf32>
    %cst_29 = arith.constant dense<0.000000e+00> : vector<8xf32>
    %90 = vector.multi_reduction <add>, %89, %cst_29 [1] : vector<8x32xf32> to vector<8xf32>
    %91 = vector.shape_cast %90 : vector<8xf32> to vector<8x1xf32>
    %cst_30 = arith.constant 3.200000e+01 : f32
    %92 = vector.broadcast %cst_30 : f32 to vector<8x1xf32>
    %93 = arith.divf %91, %92 : vector<8x1xf32>
    %94 = vector.broadcast %93 : vector<8x1xf32> to vector<8x32xf32>
    %95 = arith.subf %89, %94 : vector<8x32xf32>
    %96 = arith.mulf %95, %95 : vector<8x32xf32>
    %cst_31 = arith.constant dense<0.000000e+00> : vector<8xf32>
    %97 = vector.multi_reduction <add>, %96, %cst_31 [1] : vector<8x32xf32> to vector<8xf32>
    %98 = vector.shape_cast %97 : vector<8xf32> to vector<8x1xf32>
    %cst_32 = arith.constant 3.200000e+01 : f32
    %99 = vector.broadcast %cst_32 : f32 to vector<8x1xf32>
    %100 = arith.divf %98, %99 : vector<8x1xf32>
    %101 = vector.broadcast %93 : vector<8x1xf32> to vector<8x32xf32>
    %102 = arith.subf %89, %101 : vector<8x32xf32>
    %cst_33 = arith.constant 9.99999974E-6 : f32
    %103 = vector.broadcast %cst_33 : f32 to vector<8x1xf32>
    %104 = arith.addf %100, %103 : vector<8x1xf32>
    %105 = math.rsqrt %104 : vector<8x1xf32>
    %106 = vector.broadcast %105 : vector<8x1xf32> to vector<8x32xf32>
    %107 = arith.mulf %102, %106 : vector<8x32xf32>
    %c0_34 = arith.constant 0 : index
    %c0_35 = arith.constant 0 : index
    %108 = vector.load %arg7[%c0_34, %c0_35] : memref<1x32xf32, #tpu.memory_space<vmem>>, vector<1x32xf32>
    %109 = vector.broadcast %108 : vector<1x32xf32> to vector<8x32xf32>
    %110 = arith.mulf %107, %109 : vector<8x32xf32>
    %c0_36 = arith.constant 0 : index
    %c0_37 = arith.constant 0 : index
    %111 = vector.load %arg8[%c0_36, %c0_37] : memref<1x32xf32, #tpu.memory_space<vmem>>, vector<1x32xf32>
    %112 = vector.broadcast %111 : vector<1x32xf32> to vector<8x32xf32>
    %113 = arith.addf %110, %112 : vector<8x32xf32>
    %114 = arith.truncf %113 : vector<8x32xf32> to vector<8x32xbf16>
    %c0_38 = arith.constant 0 : index
    %c0_39 = arith.constant 0 : index
    %115 = vector.load %arg9[%c0_38, %c0_39] : memref<8x32xbf16, #tpu.memory_space<vmem>>, vector<8x32xbf16>
    tpu.vector_store %arg9[%c0_38, %c0_39], %114 {strides = array<i32>} : memref<8x32xbf16, #tpu.memory_space<vmem>>, vector<8x32xbf16>,
    return
  }
  func.func @transform_0(%arg0: i32) -> (i32, i32) {
    %c0_i32 = arith.constant 0 : i32
    %c0_i32_0 = arith.constant 0 : i32
    return %arg0, %c0_i32 : i32, i32
  }
  func.func @transform_1(%arg0: i32) -> (i32, i32, i32) {
    %c0_i32 = arith.constant 0 : i32
    %c0_i32_0 = arith.constant 0 : i32
    %c0_i32_1 = arith.constant 0 : i32
    return %arg0, %c0_i32, %c0_i32_0 : i32, i32, i32
  }
  func.func @transform_2(%arg0: i32) -> (i32, i32) {
    %c0_i32 = arith.constant 0 : i32
    %c0_i32_0 = arith.constant 0 : i32
    %c0_i32_1 = arith.constant 0 : i32
    return %c0_i32, %c0_i32_0 : i32, i32
  }
  func.func @transform_3(%arg0: i32) -> (i32, i32) {
    %c0_i32 = arith.constant 0 : i32
    %c0_i32_0 = arith.constant 0 : i32
    %c0_i32_1 = arith.constant 0 : i32
    return %c0_i32, %c0_i32_0 : i32, i32
  }
  func.func @transform_4(%arg0: i32) -> (i32, i32) {
    %c0_i32 = arith.constant 0 : i32
    %c0_i32_0 = arith.constant 0 : i32
    %c0_i32_1 = arith.constant 0 : i32
    return %c0_i32, %c0_i32_0 : i32, i32
  }
  func.func @transform_5(%arg0: i32) -> (i32, i32) {
    %c0_i32 = arith.constant 0 : i32
    %c0_i32_0 = arith.constant 0 : i32
    %c0_i32_1 = arith.constant 0 : i32
    return %c0_i32, %c0_i32_0 : i32, i32
  }
  func.func @transform_6(%arg0: i32) -> (i32, i32) {
    %c0_i32 = arith.constant 0 : i32
    %c0_i32_0 = arith.constant 0 : i32
    %c0_i32_1 = arith.constant 0 : i32
    return %c0_i32, %c0_i32_0 : i32, i32
  }
  func.func @transform_7(%arg0: i32) -> (i32, i32) {
    %c0_i32 = arith.constant 0 : i32
    %c0_i32_0 = arith.constant 0 : i32
    %c0_i32_1 = arith.constant 0 : i32
    return %c0_i32, %c0_i32_0 : i32, i32
  }
  func.func @transform_8(%arg0: i32) -> (i32, i32) {
    %c0_i32 = arith.constant 0 : i32
    %c0_i32_0 = arith.constant 0 : i32
    return %arg0, %c0_i32 : i32, i32
  }
}

</mosaic_0001>

<llo_original>
// kernel: _lambda_.5
$region0: #{_lambda_.5}
  #allocation0 [shape = 'u32[]', space=smem, size = 0x4, offset = 0x4, fixed_abs, tag = 'smem constant byte address 0x4 - core index']
  #allocation1 [shape = 'u32[144,128]{1,0:T(1,128)}', space=vmem, size = 0x12000, scoped, tag = 'internal scratch']
  %s0 = inlined_call_operand.vmem [shape: bf16[16,32], index: 0, kind: input, shape index: {}]
  %s1 = inlined_call_operand.vmem [shape: bf16[8,32], index: 1, kind: input, shape index: {}]
  %s2 = inlined_call_operand.vmem [shape: f32[1,32], index: 2, kind: input, shape index: {}]
  %s3 = inlined_call_operand.vmem [shape: f32[1,32], index: 3, kind: input, shape index: {}]
  %s4 = inlined_call_operand.vmem [shape: bf16[16,32], index: 4, kind: output, shape index: {}]
  %s5 = sld [smem:[#allocation0]]
  $region49: #{_lambda_.5} parent=0
    _
  %s7 = ssub.s32 1, %s5
  %s8 = scalar_select 0, %s7, %s5
  loop: start=0, step=1, limit=4
  $region2: #{_lambda_.5} parent=0 // loop_pre_header
    _
  $region3: #{_lambda_.5} parent=0 // loop_header
    %s10 = sphi 0, %s14
    %p11 = scmp.ge.s32.totalorder %s10, 4
    %s20 = sphi 0, %s22
    %s23 = sphi 0, %s20
    %s24 = sphi 0, %s23
    %s40 = sphi 0, %s24
    %s44 = sphi 0, %s44
    %s46 = sphi 0, %s44
    %s47 = sphi 0, %s46
    %s61 = sphi 0, %s47
    %s65 = sphi 0, %s65
    %s67 = sphi 0, %s65
    %s68 = sphi 0, %s67
    %s82 = sphi 0, %s68
    %s86 = sphi 0, %s86
    %s88 = sphi 0, %s86
    %s89 = sphi 0, %s88
    %s103 = sphi 0, %s89
    %s109 = sphi 0, %s111
    %s112 = sphi 0, %s109
    %s113 = sphi 0, %s112
    %s129 = sphi 0, %s113
  $region4: #{_lambda_.5} parent=0 // loop_header_branch
    %13 = sbr.rel (%p11) target = $region8
  $region5: #{_lambda_.5} parent=0 // loop_body
    %s15 = ssub.s32 %s10, 1
    %s16 = ssub.s32 %s10, 2
    %s17 = sadd.s32 %s10, 1
    %s18 = ssub.s32 %s10, %s17
    %p19 = scmp.eq.s32.totalorder %s18, 0
    %s21 = sadd.s32 %s20, 1
    %s22 = scalar_select %p19, %s20, %s21
    %p25 = pneg %p19
    %p26 = scmp.eq.s32.totalorder %s10, 1
    %p27 = por %p25, %p26
    %p28 = scmp.ne.s32.totalorder %s20, %s23
    %p29 = scmp.eq.s32.totalorder %s10, 0
    %p30 = por %p28, %p29
    %p31 = scmp.ne.s32.totalorder %s20, %s23
    %p32 = scmp.eq.s32.totalorder %s15, 1
    %p33 = por %p31, %p32
    %p34 = scmp.ne.s32.totalorder %s23, %s24
    %p35 = scmp.eq.s32.totalorder %s15, 0
    %p36 = por %p34, %p35
    %p37 = scmp.ne.s32.totalorder %s23, %s24
    %p38 = scmp.eq.s32.totalorder %s16, 1
    %p39 = por %p37, %p38
    %p41 = scmp.ne.s32.totalorder %s24, %s40
    %p42 = scmp.eq.s32.totalorder %s16, 0
    %p43 = por %p41, %p42
    %s45 = sadd.s32 %s44, 1
    %p48 = scmp.eq.s32.totalorder %s10, 1
    %p49 = scmp.ne.s32.totalorder %s44, %s46
    %p50 = scmp.eq.s32.totalorder %s10, 0
    %p51 = por %p49, %p50
    %p52 = scmp.ne.s32.totalorder %s44, %s46
    %p53 = scmp.eq.s32.totalorder %s15, 1
    %p54 = por %p52, %p53
    %p55 = scmp.ne.s32.totalorder %s46, %s47
    %p56 = scmp.eq.s32.totalorder %s15, 0
    %p57 = por %p55, %p56
    %p58 = scmp.ne.s32.totalorder %s46, %s47
    %p59 = scmp.eq.s32.totalorder %s16, 1
    %p60 = por %p58, %p59
    %p62 = scmp.ne.s32.totalorder %s47, %s61
    %p63 = scmp.eq.s32.totalorder %s16, 0
    %p64 = por %p62, %p63
    %s66 = sadd.s32 %s65, 1
    %p69 = scmp.eq.s32.totalorder %s10, 1
    %p70 = scmp.ne.s32.totalorder %s65, %s67
    %p71 = scmp.eq.s32.totalorder %s10, 0
    %p72 = por %p70, %p71
    %p73 = scmp.ne.s32.totalorder %s65, %s67
    %p74 = scmp.eq.s32.totalorder %s15, 1
    %p75 = por %p73, %p74
    %p76 = scmp.ne.s32.totalorder %s67, %s68
    %p77 = scmp.eq.s32.totalorder %s15, 0
    %p78 = por %p76, %p77
    %p79 = scmp.ne.s32.totalorder %s67, %s68
    %p80 = scmp.eq.s32.totalorder %s16, 1
    %p81 = por %p79, %p80
    %p83 = scmp.ne.s32.totalorder %s68, %s82
    %p84 = scmp.eq.s32.totalorder %s16, 0
    %p85 = por %p83, %p84
    %s87 = sadd.s32 %s86, 1
    %p90 = scmp.eq.s32.totalorder %s10, 1
    %p91 = scmp.ne.s32.totalorder %s86, %s88
    %p92 = scmp.eq.s32.totalorder %s10, 0
    %p93 = por %p91, %p92
    %p94 = scmp.ne.s32.totalorder %s86, %s88
    %p95 = scmp.eq.s32.totalorder %s15, 1
    %p96 = por %p94, %p95
    %p97 = scmp.ne.s32.totalorder %s88, %s89
    %p98 = scmp.eq.s32.totalorder %s15, 0
    %p99 = por %p97, %p98
    %p100 = scmp.ne.s32.totalorder %s88, %s89
    %p101 = scmp.eq.s32.totalorder %s16, 1
    %p102 = por %p100, %p101
    %p104 = scmp.ne.s32.totalorder %s89, %s103
    %p105 = scmp.eq.s32.totalorder %s16, 0
    %p106 = por %p104, %p105
    %s107 = ssub.s32 %s10, %s17
    %p108 = scmp.eq.s32.totalorder %s107, 0
    %s110 = sadd.s32 %s109, 1
    %s111 = scalar_select %p108, %s109, %s110
    %p114 = pneg %p108
    %p115 = scmp.eq.s32.totalorder %s10, 1
    %p116 = por %p114, %p115
    %p117 = scmp.ne.s32.totalorder %s109, %s112
    %p118 = scmp.eq.s32.totalorder %s10, 0
    %p119 = por %p117, %p118
    %p120 = scmp.ne.s32.totalorder %s109, %s112
    %p121 = scmp.eq.s32.totalorder %s15, 1
    %p122 = por %p120, %p121
    %p123 = scmp.ne.s32.totalorder %s112, %s113
    %p124 = scmp.eq.s32.totalorder %s15, 0
    %p125 = por %p123, %p124
    %p126 = scmp.ne.s32.totalorder %s112, %s113
    %p127 = scmp.eq.s32.totalorder %s16, 1
    %p128 = por %p126, %p127
    %p130 = scmp.ne.s32.totalorder %s113, %s129
    %p131 = scmp.eq.s32.totalorder %s16, 0
    %p132 = por %p130, %p131
    %p133 = scmp.le.s32.totalorder 1, %s10
    %p134 = scmp.lt.s32.totalorder %s10, 3
    %p135 = pnand %p133, %p134
    %p136 = pneg %p135
    // Predicated region
    $region9: #{_lambda_.5} parent=5 // pred_check
      _
    $region10: #{_lambda_.5} parent=5 // pred_check_branch
      %138 = sbr.rel (%p135) target = $region12
    $region11: #{_lambda_.5} parent=5 // pred_region
      %s139 = ssub.s32 %s10, 1
      // Predicated region
      $region13: #{_lambda_.5} parent=11 // pred_check
        %p140 = pneg %p57
      $region14: #{_lambda_.5} parent=11 // pred_check_branch
        %142 = sbr.rel (%p140) target = $region16
      $region15: #{_lambda_.5} parent=11 // pred_region
        _
      $region16: #{_lambda_.5} parent=11 // pred_fallthru
        _
      // Predicated region
      $region17: #{_lambda_.5} parent=11 // pred_check
        %p143 = pneg %p78
      $region18: #{_lambda_.5} parent=11 // pred_check_branch
        %145 = sbr.rel (%p143) target = $region20
      $region19: #{_lambda_.5} parent=11 // pred_region
        _
      $region20: #{_lambda_.5} parent=11 // pred_fallthru
        _
      // Predicated region
      $region21: #{_lambda_.5} parent=11 // pred_check
        %p146 = pneg %p99
      $region22: #{_lambda_.5} parent=11 // pred_check_branch
        %148 = sbr.rel (%p146) target = $region24
      $region23: #{_lambda_.5} parent=11 // pred_region
        _
      $region24: #{_lambda_.5} parent=11 // pred_fallthru
        _
    $region12: #{_lambda_.5} parent=5 // pred_fallthru
      _
    %p149 = scmp.lt.s32.totalorder %s10, 2
    // Predicated region
    $region25: #{_lambda_.5} parent=5 // pred_check
      %p150 = pneg %p149
    $region26: #{_lambda_.5} parent=5 // pred_check_branch
      %152 = sbr.rel (%p150) target = $region28
    $region27: #{_lambda_.5} parent=5 // pred_region
      // Predicated region
      $region29: #{_lambda_.5} parent=27 // pred_check
        %p153 = pneg %p30
      $region30: #{_lambda_.5} parent=27 // pred_check_branch
        %155 = sbr.rel (%p153) target = $region32
      $region31: #{_lambda_.5} parent=27 // pred_region
        %p156 = scmp.lt.s32.totalorder %s10, 1
        %s157 = scalar_select %p156, %s10, 1
        %s158 = smul.addr %s157, 4
        %s159 = scalar_lea.vmem %s0, %s158
      $region32: #{_lambda_.5} parent=27 // pred_fallthru
        _
    $region28: #{_lambda_.5} parent=5 // pred_fallthru
      _
    %p160 = scmp.le.s32.totalorder 1, %s10
    %p161 = scmp.lt.s32.totalorder %s10, 3
    %p162 = pnand %p160, %p161
    %p163 = pneg %p162
    // Predicated region
    $region33: #{_lambda_.5} parent=5 // pred_check
      _
    $region34: #{_lambda_.5} parent=5 // pred_check_branch
      %165 = sbr.rel (%p162) target = $region36
    $region35: #{_lambda_.5} parent=5 // pred_region
      %s166 = ssub.s32 %s10, 1
      %p167 = scmp.lt.s32.totalorder %s15, 1
      %s168 = scalar_select %p167, %s15, 1
      %s169 = smul.addr %s168, 4
      %s170 = scalar_lea.vmem %s0, %s169
      %p171 = pneg %p36
      %p172 = pneg %p33
      %p173 = pneg %p57
      %p174 = pneg %p54
      %p175 = pneg %p78
      %p176 = pneg %p75
      %p177 = pneg %p99
      %p178 = pneg %p96
      %p179 = pneg %p125
      %p180 = pneg %p122
      %p181 = scmp.lt.s32.totalorder %s15, 1
      %s182 = scalar_select %p181, %s15, 1
      %s183 = smul.addr %s182, 4
      %s184 = scalar_lea.vmem %s4, %s183
      %p185 = scmp.lt.s32.totalorder %s15, 1
      %s186 = scalar_select %p185, %s15, 1
      %s187 = smul.addr %s186, 4
      %s188 = scalar_lea.vmem %s0, %s187
      %p189 = scmp.lt.s32.totalorder %s15, 1
      %s190 = scalar_select %p189, %s15, 1
      %s191 = smul.addr %s190, 4
      %s192 = scalar_lea.vmem %s4, %s191
      %v193 = vld [vmem:[%s188] sm:$0xf]
      %v194 = vunpack.c.l.bf16 %v193
      %v195 = vld [vmem:[%s1] sm:$0xf]
      %v196 = vunpack.c.l.bf16 %v195
      %v197 = vadd.f32 %v194, %v196
      %vm198 = vcmask 261120
      %v199 = vsel %vm198, %v197, 0.0
      %200 = vadd.xlane.f32.xlu0 %v199
      %v201 = vpop.xlane.xlu0 %200
      %v202 = vrcp.pop 32.0
      %v203 = vmul.f32 %v201, %v202
      %v204 = vsub.f32 %v197, %v203
      %v205 = vmul.f32 %v204, %v204
      %v206 = vsel %vm198, %v205, 0.0
      %207 = vadd.xlane.f32.xlu0 %v206
      %v208 = vpop.xlane.xlu0 %207
      %v209 = vmul.f32 %v208, %v202
      %v210 = vadd.f32 %v209, 1e-05
      %v211 = vrsqrt.pop %v210
      %v212 = vmul.f32 %v204, %v211
      %v213 = vld [vmem:[%s2] sm:$0x1]
      %v215 = vlaneseq
      %v216 = vshrl.u32 %v215, 7
      %v217 = vsub.s32 0, %v216
      %v218 = vrot.slane %v213, %v217
      %v220 = vmul.f32 %v212, %v218
      %v221 = vld [vmem:[%s3] sm:$0x1]
      %v223 = vlaneseq
      %v224 = vshrl.u32 %v223, 7
      %v225 = vsub.s32 0, %v224
      %v226 = vrot.slane %v221, %v225
      %v228 = vadd.f32 %v220, %v226
      %v229 = vpack.c.bf16 %v228, %v228
      %vm230 = vcmask 257024
      %231 = vst.msk [vmem:[%s192] sm:$0xf] %vm230, %v229
      %p232 = scmp.lt.s32.totalorder %s15, 1
      %s233 = scalar_select %p232, %s15, 1
      %s234 = smul.addr %s233, 4
      %s235 = scalar_lea.vmem %s4, %s234
      // Predicated region
      $region37: #{_lambda_.5} parent=35 // pred_check
        %p236 = pneg %p122
      $region38: #{_lambda_.5} parent=35 // pred_check_branch
        %238 = sbr.rel (%p236) target = $region40
      $region39: #{_lambda_.5} parent=35 // pred_region
        _
      $region40: #{_lambda_.5} parent=35 // pred_fallthru
        _
    $region36: #{_lambda_.5} parent=5 // pred_fallthru
      _
    %p239 = scmp.le.s32.totalorder 2, %s10
    // Predicated region
    $region41: #{_lambda_.5} parent=5 // pred_check
      %p240 = pneg %p239
    $region42: #{_lambda_.5} parent=5 // pred_check_branch
      %242 = sbr.rel (%p240) target = $region44
    $region43: #{_lambda_.5} parent=5 // pred_region
      %s243 = ssub.s32 %s10, 2
      // Predicated region
      $region45: #{_lambda_.5} parent=43 // pred_check
        %p244 = pneg %p128
      $region46: #{_lambda_.5} parent=43 // pred_check_branch
        %246 = sbr.rel (%p244) target = $region48
      $region47: #{_lambda_.5} parent=43 // pred_region
        %p247 = scmp.lt.s32.totalorder %s16, 1
        %s248 = scalar_select %p247, %s16, 1
        %s249 = smul.addr %s248, 4
        %s250 = scalar_lea.vmem %s4, %s249
      $region48: #{_lambda_.5} parent=43 // pred_fallthru
        _
    $region44: #{_lambda_.5} parent=5 // pred_fallthru
      _
  $region6: #{_lambda_.5} parent=0 // loop_footer
    %s14 = sadd.s32 1, %s10
  $region7: #{_lambda_.5} parent=0 // loop_footer_branch
    %9 = sbr.rel target = $region3
  $region8: #{_lambda_.5} parent=0 // loop_exit
    _

// kernel: _lambda_.7
$region0: #{_lambda_.7}
  #allocation0 [shape = 'u32[]', space=smem, size = 0x4, offset = 0x4, fixed_abs, tag = 'smem constant byte address 0x4 - core index']
  #allocation1 [shape = 'u32[144,128]{1,0:T(1,128)}', space=vmem, size = 0x12000, scoped, tag = 'internal scratch']
  %s0 = inlined_call_operand.vmem [shape: bf16[16,32], index: 0, kind: input, shape index: {}]
  %s1 = inlined_call_operand.vmem [shape: bf16[32,64], index: 1, kind: input, shape index: {}]
  %s2 = inlined_call_operand.vmem [shape: f32[1,64], index: 2, kind: input, shape index: {}]
  %s3 = inlined_call_operand.vmem [shape: bf16[64,32], index: 3, kind: input, shape index: {}]
  %s4 = inlined_call_operand.vmem [shape: f32[1,32], index: 4, kind: input, shape index: {}, may-alias: {4,6}]
  %s5 = inlined_call_operand.vmem [shape: f32[1,32], index: 5, kind: input, shape index: {}]
  %s6 = inlined_call_operand.vmem [shape: f32[1,32], index: 6, kind: input, shape index: {}, may-alias: {4,6}]
  %s7 = inlined_call_operand.vmem [shape: bf16[16,32], index: 7, kind: output, shape index: {}]
  %s8 = sld [smem:[#allocation0]]
  $region38: #{_lambda_.7} parent=0
    _
  %s10 = ssub.s32 1, %s8
  %s11 = scalar_select 0, %s10, %s8
  // Predicated region
  $region2: #{_lambda_.7} parent=0 // pred_check
    _
  $region3: #{_lambda_.7} parent=0 // pred_check_branch
    %13 = sbr.rel (0) target = $region5
  $region4: #{_lambda_.7} parent=0 // pred_region
    _
  $region5: #{_lambda_.7} parent=0 // pred_fallthru
    _
  // Predicated region
  $region6: #{_lambda_.7} parent=0 // pred_check
    _
  $region7: #{_lambda_.7} parent=0 // pred_check_branch
    %15 = sbr.rel (0) target = $region9
  $region8: #{_lambda_.7} parent=0 // pred_region
    _
  $region9: #{_lambda_.7} parent=0 // pred_fallthru
    _
  // Predicated region
  $region10: #{_lambda_.7} parent=0 // pred_check
    _
  $region11: #{_lambda_.7} parent=0 // pred_check_branch
    %17 = sbr.rel (0) target = $region13
  $region12: #{_lambda_.7} parent=0 // pred_region
    _
  $region13: #{_lambda_.7} parent=0 // pred_fallthru
    _
  // Predicated region
  $region14: #{_lambda_.7} parent=0 // pred_check
    _
  $region15: #{_lambda_.7} parent=0 // pred_check_branch
    %19 = sbr.rel (0) target = $region17
  $region16: #{_lambda_.7} parent=0 // pred_region
    _
  $region17: #{_lambda_.7} parent=0 // pred_fallthru
    _
  // Predicated region
  $region18: #{_lambda_.7} parent=0 // pred_check
    _
  $region19: #{_lambda_.7} parent=0 // pred_check_branch
    %21 = sbr.rel (0) target = $region21
  $region20: #{_lambda_.7} parent=0 // pred_region
    _
  $region21: #{_lambda_.7} parent=0 // pred_fallthru
    _
  // Predicated region
  $region22: #{_lambda_.7} parent=0 // pred_check
    _
  $region23: #{_lambda_.7} parent=0 // pred_check_branch
    %23 = sbr.rel (0) target = $region25
  $region24: #{_lambda_.7} parent=0 // pred_region
    _
  $region25: #{_lambda_.7} parent=0 // pred_fallthru
    _
  // Predicated region
  $region26: #{_lambda_.7} parent=0 // pred_check
    _
  $region27: #{_lambda_.7} parent=0 // pred_check_branch
    %25 = sbr.rel (0) target = $region29
  $region28: #{_lambda_.7} parent=0 // pred_region
    _
  $region29: #{_lambda_.7} parent=0 // pred_fallthru
    _
  %v27 = vld [vmem:[%s0] sm:$0xf]
  %v28 = vld [vmem:[%s0 + $0x4] sm:$0xf]
  %v29 = vld [vmem:[%s1] sm:$0xf]
  %v30 = vld [vmem:[%s1 + $0x4] sm:$0xf]
  %v31 = vld [vmem:[%s1 + $0x8] sm:$0xf]
  %v32 = vld [vmem:[%s1 + $0xc] sm:$0xf]
  %v33 = vld [vmem:[%s2] sm:$0x1]
  %v35 = vlaneseq
  %v36 = vshrl.u32 %v35, 7
  %v37 = vsub.s32 0, %v36
  %v38 = vrot.slane %v33, %v37
  %v42 = vunpack.c.l.b16 %v27
  %v43 = vunpack.c.l.b16 %v28
  %v44 = vpack.c.b16 %v43, %v42
  %v49 = vunpack.c.l.b16 %v29
  %v50 = vunpack.c.l.b16 %v30
  %v51 = vunpack.c.l.b16 %v31
  %v52 = vunpack.c.l.b16 %v32
  %v53 = vpack.c.b16 %v50, %v49
  %v54 = vpack.c.b16 %v52, %v51
  %vm57 = vcmask 261120
  %v59 = vsel %vm57, %v44, 0
  %61 = vmatprep.subr.bf16.mxu0 0
  %62 = vmatpush1.bf16.msra.mxu0 0
  %63 = vmatprep.subr.bf16.mxu0 0
  %64 = vmatpush1.bf16.msra.mxu0 0
  %65 = vmatprep.subr.bf16.mxu0 0
  %66 = vmatpush1.bf16.msra.mxu0 0
  %67 = vmatprep.subr.bf16.mxu0 0
  %68 = vmatpush1.bf16.msra.mxu0 0
  %69 = vmatprep.subr.bf16.mxu0 0
  %70 = vmatpush1.bf16.msra.mxu0 0
  %71 = vmatprep.subr.bf16.mxu0 0
  %72 = vmatpush1.bf16.msra.mxu0 0
  %73 = vmatprep.subr.bf16.mxu0 0
  %74 = vmatpush1.bf16.msra.mxu0 %v54
  %75 = vmatprep.subr.bf16.mxu0 0
  %76 = vmatpush1.bf16.msra.mxu0 %v53
  %77 = vmatprep.subr.bf16.mxu0 0
  %78 = vmatpush2.bf16.msra.mxu0 0
  %79 = vmatprep.subr.bf16.mxu0 0
  %80 = vmatpush2.bf16.msra.mxu0 0
  %81 = vmatprep.subr.bf16.mxu0 0
  %82 = vmatpush2.bf16.msra.mxu0 0
  %83 = vmatprep.subr.bf16.mxu0 0
  %84 = vmatpush2.bf16.msra.mxu0 0
  %85 = vmatprep.subr.bf16.mxu0 0
  %86 = vmatpush2.bf16.msra.mxu0 0
  %87 = vmatprep.subr.bf16.mxu0 0
  %88 = vmatpush2.bf16.msra.mxu0 0
  %89 = vmatprep.subr.bf16.mxu0 0
  %90 = vmatpush2.bf16.msra.mxu0 0
  %91 = vmatprep.subr.bf16.mxu0 0
  %92 = vmatpush2.bf16.msra.mxu0 0
  %93 = vmatprep.mubr.bf16.mxu0 0
  %94 = vmatmul.mubr.bf16.gmra.mxu0 %v59
  %v95 = vpop.f32.mrf.mxu0
  %v96 = vadd.f32 %v38, %v95
  %v97 = vpop.f32.mrf.mxu0
  %v98 = vpop.f32.mrf.mxu0
  %v99 = vadd.f32 %v38, %v98
  %v100 = vpop.f32.mrf.mxu0
  %101 = vdwg.mxu0
  %v102 = vmax.f32 %v96, 0.0
  %v103 = vmax.f32 %v99, 0.0
  %v104 = vpack.c.bf16 %v103, %v102
  %v105 = vld [vmem:[%s3] sm:$0xf]
  %v106 = vld [vmem:[%s3 + $0x4] sm:$0xf]
  %v107 = vld [vmem:[%s3 + $0x8] sm:$0xf]
  %v108 = vld [vmem:[%s3 + $0xc] sm:$0xf]
  %v109 = vld [vmem:[%s3 + $0x10] sm:$0xf]
  %v110 = vld [vmem:[%s3 + $0x14] sm:$0xf]
  %v111 = vld [vmem:[%s3 + $0x18] sm:$0xf]
  %v112 = vld [vmem:[%s3 + $0x1c] sm:$0xf]
  %v113 = vld [vmem:[%s4] sm:$0x1]
  %v115 = vlaneseq
  %v116 = vshrl.u32 %v115, 7
  %v117 = vsub.s32 0, %v116
  %v118 = vrot.slane %v113, %v117
  %v128 = vunpack.c.l.b16 %v105
  %v129 = vunpack.c.l.b16 %v106
  %v130 = vunpack.c.l.b16 %v107
  %v131 = vunpack.c.l.b16 %v108
  %v132 = vunpack.c.l.b16 %v109
  %v133 = vunpack.c.l.b16 %v110
  %v134 = vunpack.c.l.b16 %v111
  %v135 = vunpack.c.l.b16 %v112
  %v136 = vpack.c.b16 %v129, %v128
  %v137 = vpack.c.b16 %v131, %v130
  %v138 = vpack.c.b16 %v133, %v132
  %v139 = vpack.c.b16 %v135, %v134
  %vm144 = vcmask 523264
  %v146 = vsel %vm144, %v104, 0
  %148 = vmatprep.subr.bf16.mxu0 0
  %149 = vmatpush1.bf16.msra.mxu0 0
  %150 = vmatprep.subr.bf16.mxu0 0
  %151 = vmatpush1.bf16.msra.mxu0 0
  %152 = vmatprep.subr.bf16.mxu0 0
  %153 = vmatpush1.bf16.msra.mxu0 0
  %154 = vmatprep.subr.bf16.mxu0 0
  %155 = vmatpush1.bf16.msra.mxu0 0
  %156 = vmatprep.subr.bf16.mxu0 0
  %157 = vmatpush1.bf16.msra.mxu0 %v139
  %158 = vmatprep.subr.bf16.mxu0 0
  %159 = vmatpush1.bf16.msra.mxu0 %v138
  %160 = vmatprep.subr.bf16.mxu0 0
  %161 = vmatpush1.bf16.msra.mxu0 %v137
  %162 = vmatprep.subr.bf16.mxu0 0
  %163 = vmatpush1.bf16.msra.mxu0 %v136
  %164 = vmatprep.subr.bf16.mxu0 0
  %165 = vmatpush2.bf16.msra.mxu0 0
  %166 = vmatprep.subr.bf16.mxu0 0
  %167 = vmatpush2.bf16.msra.mxu0 0
  %168 = vmatprep.subr.bf16.mxu0 0
  %169 = vmatpush2.bf16.msra.mxu0 0
  %170 = vmatprep.subr.bf16.mxu0 0
  %171 = vmatpush2.bf16.msra.mxu0 0
  %172 = vmatprep.subr.bf16.mxu0 0
  %173 = vmatpush2.bf16.msra.mxu0 0
  %174 = vmatprep.subr.bf16.mxu0 0
  %175 = vmatpush2.bf16.msra.mxu0 0
  %176 = vmatprep.subr.bf16.mxu0 0
  %177 = vmatpush2.bf16.msra.mxu0 0
  %178 = vmatprep.subr.bf16.mxu0 0
  %179 = vmatpush2.bf16.msra.mxu0 0
  %180 = vmatprep.mubr.bf16.mxu0 0
  %181 = vmatmul.mubr.bf16.gmra.mxu0 %v146
  %v182 = vpop.f32.mrf.mxu0
  %v183 = vadd.f32 %v118, %v182
  %v184 = vpop.f32.mrf.mxu0
  %v185 = vpop.f32.mrf.mxu0
  %v186 = vadd.f32 %v118, %v185
  %v187 = vpop.f32.mrf.mxu0
  %188 = vdwg.mxu0
  %v189 = vunpack.c.l.bf16 %v27
  %v190 = vunpack.c.l.bf16 %v28
  %v191 = vadd.f32 %v183, %v189
  %v192 = vadd.f32 %v186, %v190
  %v193 = vsel %vm57, %v191, 0.0
  %194 = vadd.xlane.f32.xlu0 %v193
  %v195 = vpop.xlane.xlu0 %194
  %v196 = vsel %vm57, %v192, 0.0
  %197 = vadd.xlane.f32.xlu0 %v196
  %v198 = vpop.xlane.xlu0 %197
  %v199 = vrcp.pop 32.0
  %v200 = vmul.f32 %v195, %v199
  %v201 = vmul.f32 %v198, %v199
  %v202 = vsub.f32 %v191, %v200
  %v203 = vsub.f32 %v192, %v201
  %v204 = vmul.f32 %v202, %v202
  %v205 = vmul.f32 %v203, %v203
  %v206 = vsel %vm57, %v204, 0.0
  %207 = vadd.xlane.f32.xlu0 %v206
  %v208 = vpop.xlane.xlu0 %207
  %v209 = vsel %vm57, %v205, 0.0
  %210 = vadd.xlane.f32.xlu0 %v209
  %v211 = vpop.xlane.xlu0 %210
  %v212 = vmul.f32 %v208, %v199
  %v213 = vmul.f32 %v211, %v199
  %v214 = vadd.f32 %v212, 1e-05
  %v215 = vadd.f32 %v213, 1e-05
  %v216 = vrsqrt.pop %v214
  %v217 = vrsqrt.pop %v215
  %v218 = vmul.f32 %v202, %v216
  %v219 = vmul.f32 %v203, %v217
  %v220 = vld [vmem:[%s5] sm:$0x1]
  %v222 = vlaneseq
  %v223 = vshrl.u32 %v222, 7
  %v224 = vsub.s32 0, %v223
  %v225 = vrot.slane %v220, %v224
  %v227 = vmul.f32 %v218, %v225
  %v228 = vmul.f32 %v219, %v225
  %v229 = vld [vmem:[%s6] sm:$0x1]
  %v231 = vlaneseq
  %v232 = vshrl.u32 %v231, 7
  %v233 = vsub.s32 0, %v232
  %v234 = vrot.slane %v229, %v233
  %v236 = vadd.f32 %v227, %v234
  %v237 = vadd.f32 %v228, %v234
  %v238 = vpack.c.bf16 %v237, %v236
  %v240 = vunpack.c.l.b16 %v238
  %v241 = vunpack.c.h.b16 %v238
  %v242 = vpack.c.b16 %v240, %v240
  %v243 = vpack.c.b16 %v241, %v241
  %vm246 = vcmask 257024
  %247 = vst.msk [vmem:[%s7] sm:$0xf] %vm246, %v242
  %248 = vst.msk [vmem:[%s7 + $0x4] sm:$0xf] %vm246, %v243
  // Predicated region
  $region30: #{_lambda_.7} parent=0 // pred_check
    _
  $region31: #{_lambda_.7} parent=0 // pred_check_branch
    %250 = sbr.rel (0) target = $region33
  $region32: #{_lambda_.7} parent=0 // pred_region
    _
  $region33: #{_lambda_.7} parent=0 // pred_fallthru
    _
  // Predicated region
  $region34: #{_lambda_.7} parent=0 // pred_check
    _
  $region35: #{_lambda_.7} parent=0 // pred_check_branch
    %252 = sbr.rel (0) target = $region37
  $region36: #{_lambda_.7} parent=0 // pred_region
    _
  $region37: #{_lambda_.7} parent=0 // pred_fallthru
    _

// kernel: _lambda_.6
$region0: #{_lambda_.6}
  #allocation0 [shape = 'u32[]', space=smem, size = 0x4, offset = 0x4, fixed_abs, tag = 'smem constant byte address 0x4 - core index']
  #allocation1 [shape = 'u32[144,128]{1,0:T(1,128)}', space=vmem, size = 0x12000, scoped, tag = 'internal scratch']
  %s0 = inlined_call_operand.vmem [shape: bf16[16,32], index: 0, kind: input, shape index: {}]
  %s1 = inlined_call_operand.vmem [shape: f32[2,1,8], index: 1, kind: input, shape index: {}]
  %s2 = inlined_call_operand.vmem [shape: bf16[32,96], index: 2, kind: input, shape index: {}]
  %s3 = inlined_call_operand.vmem [shape: f32[1,96], index: 3, kind: input, shape index: {}]
  %s4 = inlined_call_operand.vmem [shape: bf16[32,32], index: 4, kind: input, shape index: {}]
  %s5 = inlined_call_operand.vmem [shape: f32[1,32], index: 5, kind: input, shape index: {}, may-alias: {5,7}]
  %s6 = inlined_call_operand.vmem [shape: f32[1,32], index: 6, kind: input, shape index: {}]
  %s7 = inlined_call_operand.vmem [shape: f32[1,32], index: 7, kind: input, shape index: {}, may-alias: {5,7}]
  %s8 = inlined_call_operand.vmem [shape: bf16[16,32], index: 8, kind: output, shape index: {}]
  %s9 = sld [smem:[#allocation0]]
  $region65: #{_lambda_.6} parent=0
    _
  %s11 = ssub.s32 1, %s9
  %s12 = scalar_select 0, %s11, %s9
  loop: start=0, step=1, limit=4
  $region2: #{_lambda_.6} parent=0 // loop_pre_header
    _
  $region3: #{_lambda_.6} parent=0 // loop_header
    %s14 = sphi 0, %s18
    %p15 = scmp.ge.s32.totalorder %s14, 4
    %s24 = sphi 0, %s26
    %s27 = sphi 0, %s24
    %s28 = sphi 0, %s27
    %s44 = sphi 0, %s28
    %s50 = sphi 0, %s52
    %s53 = sphi 0, %s50
    %s54 = sphi 0, %s53
    %s70 = sphi 0, %s54
    %s74 = sphi 0, %s74
    %s76 = sphi 0, %s74
    %s77 = sphi 0, %s76
    %s91 = sphi 0, %s77
    %s95 = sphi 0, %s95
    %s97 = sphi 0, %s95
    %s98 = sphi 0, %s97
    %s112 = sphi 0, %s98
    %s116 = sphi 0, %s116
    %s118 = sphi 0, %s116
    %s119 = sphi 0, %s118
    %s133 = sphi 0, %s119
    %s137 = sphi 0, %s137
    %s139 = sphi 0, %s137
    %s140 = sphi 0, %s139
    %s154 = sphi 0, %s140
    %s158 = sphi 0, %s158
    %s160 = sphi 0, %s158
    %s161 = sphi 0, %s160
    %s175 = sphi 0, %s161
    %s179 = sphi 0, %s179
    %s181 = sphi 0, %s179
    %s182 = sphi 0, %s181
    %s196 = sphi 0, %s182
    %s202 = sphi 0, %s204
    %s205 = sphi 0, %s202
    %s206 = sphi 0, %s205
    %s222 = sphi 0, %s206
  $region4: #{_lambda_.6} parent=0 // loop_header_branch
    %17 = sbr.rel (%p15) target = $region8
  $region5: #{_lambda_.6} parent=0 // loop_body
    %s19 = ssub.s32 %s14, 1
    %s20 = ssub.s32 %s14, 2
    %s21 = sadd.s32 %s14, 1
    %s22 = ssub.s32 %s14, %s21
    %p23 = scmp.eq.s32.totalorder %s22, 0
    %s25 = sadd.s32 %s24, 1
    %s26 = scalar_select %p23, %s24, %s25
    %p29 = pneg %p23
    %p30 = scmp.eq.s32.totalorder %s14, 1
    %p31 = por %p29, %p30
    %p32 = scmp.ne.s32.totalorder %s24, %s27
    %p33 = scmp.eq.s32.totalorder %s14, 0
    %p34 = por %p32, %p33
    %p35 = scmp.ne.s32.totalorder %s24, %s27
    %p36 = scmp.eq.s32.totalorder %s19, 1
    %p37 = por %p35, %p36
    %p38 = scmp.ne.s32.totalorder %s27, %s28
    %p39 = scmp.eq.s32.totalorder %s19, 0
    %p40 = por %p38, %p39
    %p41 = scmp.ne.s32.totalorder %s27, %s28
    %p42 = scmp.eq.s32.totalorder %s20, 1
    %p43 = por %p41, %p42
    %p45 = scmp.ne.s32.totalorder %s28, %s44
    %p46 = scmp.eq.s32.totalorder %s20, 0
    %p47 = por %p45, %p46
    %s48 = ssub.s32 %s14, %s21
    %p49 = scmp.eq.s32.totalorder %s48, 0
    %s51 = sadd.s32 %s50, 1
    %s52 = scalar_select %p49, %s50, %s51
    %p55 = pneg %p49
    %p56 = scmp.eq.s32.totalorder %s14, 1
    %p57 = por %p55, %p56
    %p58 = scmp.ne.s32.totalorder %s50, %s53
    %p59 = scmp.eq.s32.totalorder %s14, 0
    %p60 = por %p58, %p59
    %p61 = scmp.ne.s32.totalorder %s50, %s53
    %p62 = scmp.eq.s32.totalorder %s19, 1
    %p63 = por %p61, %p62
    %p64 = scmp.ne.s32.totalorder %s53, %s54
    %p65 = scmp.eq.s32.totalorder %s19, 0
    %p66 = por %p64, %p65
    %p67 = scmp.ne.s32.totalorder %s53, %s54
    %p68 = scmp.eq.s32.totalorder %s20, 1
    %p69 = por %p67, %p68
    %p71 = scmp.ne.s32.totalorder %s54, %s70
    %p72 = scmp.eq.s32.totalorder %s20, 0
    %p73 = por %p71, %p72
    %s75 = sadd.s32 %s74, 1
    %p78 = scmp.eq.s32.totalorder %s14, 1
    %p79 = scmp.ne.s32.totalorder %s74, %s76
    %p80 = scmp.eq.s32.totalorder %s14, 0
    %p81 = por %p79, %p80
    %p82 = scmp.ne.s32.totalorder %s74, %s76
    %p83 = scmp.eq.s32.totalorder %s19, 1
    %p84 = por %p82, %p83
    %p85 = scmp.ne.s32.totalorder %s76, %s77
    %p86 = scmp.eq.s32.totalorder %s19, 0
    %p87 = por %p85, %p86
    %p88 = scmp.ne.s32.totalorder %s76, %s77
    %p89 = scmp.eq.s32.totalorder %s20, 1
    %p90 = por %p88, %p89
    %p92 = scmp.ne.s32.totalorder %s77, %s91
    %p93 = scmp.eq.s32.totalorder %s20, 0
    %p94 = por %p92, %p93
    %s96 = sadd.s32 %s95, 1
    %p99 = scmp.eq.s32.totalorder %s14, 1
    %p100 = scmp.ne.s32.totalorder %s95, %s97
    %p101 = scmp.eq.s32.totalorder %s14, 0
    %p102 = por %p100, %p101
    %p103 = scmp.ne.s32.totalorder %s95, %s97
    %p104 = scmp.eq.s32.totalorder %s19, 1
    %p105 = por %p103, %p104
    %p106 = scmp.ne.s32.totalorder %s97, %s98
    %p107 = scmp.eq.s32.totalorder %s19, 0
    %p108 = por %p106, %p107
    %p109 = scmp.ne.s32.totalorder %s97, %s98
    %p110 = scmp.eq.s32.totalorder %s20, 1
    %p111 = por %p109, %p110
    %p113 = scmp.ne.s32.totalorder %s98, %s112
    %p114 = scmp.eq.s32.totalorder %s20, 0
    %p115 = por %p113, %p114
    %s117 = sadd.s32 %s116, 1
    %p120 = scmp.eq.s32.totalorder %s14, 1
    %p121 = scmp.ne.s32.totalorder %s116, %s118
    %p122 = scmp.eq.s32.totalorder %s14, 0
    %p123 = por %p121, %p122
    %p124 = scmp.ne.s32.totalorder %s116, %s118
    %p125 = scmp.eq.s32.totalorder %s19, 1
    %p126 = por %p124, %p125
    %p127 = scmp.ne.s32.totalorder %s118, %s119
    %p128 = scmp.eq.s32.totalorder %s19, 0
    %p129 = por %p127, %p128
    %p130 = scmp.ne.s32.totalorder %s118, %s119
    %p131 = scmp.eq.s32.totalorder %s20, 1
    %p132 = por %p130, %p131
    %p134 = scmp.ne.s32.totalorder %s119, %s133
    %p135 = scmp.eq.s32.totalorder %s20, 0
    %p136 = por %p134, %p135
    %s138 = sadd.s32 %s137, 1
    %p141 = scmp.eq.s32.totalorder %s14, 1
    %p142 = scmp.ne.s32.totalorder %s137, %s139
    %p143 = scmp.eq.s32.totalorder %s14, 0
    %p144 = por %p142, %p143
    %p145 = scmp.ne.s32.totalorder %s137, %s139
    %p146 = scmp.eq.s32.totalorder %s19, 1
    %p147 = por %p145, %p146
    %p148 = scmp.ne.s32.totalorder %s139, %s140
    %p149 = scmp.eq.s32.totalorder %s19, 0
    %p150 = por %p148, %p149
    %p151 = scmp.ne.s32.totalorder %s139, %s140
    %p152 = scmp.eq.s32.totalorder %s20, 1
    %p153 = por %p151, %p152
    %p155 = scmp.ne.s32.totalorder %s140, %s154
    %p156 = scmp.eq.s32.totalorder %s20, 0
    %p157 = por %p155, %p156
    %s159 = sadd.s32 %s158, 1
    %p162 = scmp.eq.s32.totalorder %s14, 1
    %p163 = scmp.ne.s32.totalorder %s158, %s160
    %p164 = scmp.eq.s32.totalorder %s14, 0
    %p165 = por %p163, %p164
    %p166 = scmp.ne.s32.totalorder %s158, %s160
    %p167 = scmp.eq.s32.totalorder %s19, 1
    %p168 = por %p166, %p167
    %p169 = scmp.ne.s32.totalorder %s160, %s161
    %p170 = scmp.eq.s32.totalorder %s19, 0
    %p171 = por %p169, %p170
    %p172 = scmp.ne.s32.totalorder %s160, %s161
    %p173 = scmp.eq.s32.totalorder %s20, 1
    %p174 = por %p172, %p173
    %p176 = scmp.ne.s32.totalorder %s161, %s175
    %p177 = scmp.eq.s32.totalorder %s20, 0
    %p178 = por %p176, %p177
    %s180 = sadd.s32 %s179, 1
    %p183 = scmp.eq.s32.totalorder %s14, 1
    %p184 = scmp.ne.s32.totalorder %s179, %s181
    %p185 = scmp.eq.s32.totalorder %s14, 0
    %p186 = por %p184, %p185
    %p187 = scmp.ne.s32.totalorder %s179, %s181
    %p188 = scmp.eq.s32.totalorder %s19, 1
    %p189 = por %p187, %p188
    %p190 = scmp.ne.s32.totalorder %s181, %s182
    %p191 = scmp.eq.s32.totalorder %s19, 0
    %p192 = por %p190, %p191
    %p193 = scmp.ne.s32.totalorder %s181, %s182
    %p194 = scmp.eq.s32.totalorder %s20, 1
    %p195 = por %p193, %p194
    %p197 = scmp.ne.s32.totalorder %s182, %s196
    %p198 = scmp.eq.s32.totalorder %s20, 0
    %p199 = por %p197, %p198
    %s200 = ssub.s32 %s14, %s21
    %p201 = scmp.eq.s32.totalorder %s200, 0
    %s203 = sadd.s32 %s202, 1
    %s204 = scalar_select %p201, %s202, %s203
    %p207 = pneg %p201
    %p208 = scmp.eq.s32.totalorder %s14, 1
    %p209 = por %p207, %p208
    %p210 = scmp.ne.s32.totalorder %s202, %s205
    %p211 = scmp.eq.s32.totalorder %s14, 0
    %p212 = por %p210, %p211
    %p213 = scmp.ne.s32.totalorder %s202, %s205
    %p214 = scmp.eq.s32.totalorder %s19, 1
    %p215 = por %p213, %p214
    %p216 = scmp.ne.s32.totalorder %s205, %s206
    %p217 = scmp.eq.s32.totalorder %s19, 0
    %p218 = por %p216, %p217
    %p219 = scmp.ne.s32.totalorder %s205, %s206
    %p220 = scmp.eq.s32.totalorder %s20, 1
    %p221 = por %p219, %p220
    %p223 = scmp.ne.s32.totalorder %s206, %s222
    %p224 = scmp.eq.s32.totalorder %s20, 0
    %p225 = por %p223, %p224
    %p226 = scmp.le.s32.totalorder 1, %s14
    %p227 = scmp.lt.s32.totalorder %s14, 3
    %p228 = pnand %p226, %p227
    %p229 = pneg %p228
    // Predicated region
    $region9: #{_lambda_.6} parent=5 // pred_check
      _
    $region10: #{_lambda_.6} parent=5 // pred_check_branch
      %231 = sbr.rel (%p228) target = $region12
    $region11: #{_lambda_.6} parent=5 // pred_region
      %s232 = ssub.s32 %s14, 1
      // Predicated region
      $region13: #{_lambda_.6} parent=11 // pred_check
        %p233 = pneg %p87
      $region14: #{_lambda_.6} parent=11 // pred_check_branch
        %235 = sbr.rel (%p233) target = $region16
      $region15: #{_lambda_.6} parent=11 // pred_region
        _
      $region16: #{_lambda_.6} parent=11 // pred_fallthru
        _
      // Predicated region
      $region17: #{_lambda_.6} parent=11 // pred_check
        %p236 = pneg %p108
      $region18: #{_lambda_.6} parent=11 // pred_check_branch
        %238 = sbr.rel (%p236) target = $region20
      $region19: #{_lambda_.6} parent=11 // pred_region
        _
      $region20: #{_lambda_.6} parent=11 // pred_fallthru
        _
      // Predicated region
      $region21: #{_lambda_.6} parent=11 // pred_check
        %p239 = pneg %p129
      $region22: #{_lambda_.6} parent=11 // pred_check_branch
        %241 = sbr.rel (%p239) target = $region24
      $region23: #{_lambda_.6} parent=11 // pred_region
        _
      $region24: #{_lambda_.6} parent=11 // pred_fallthru
        _
      // Predicated region
      $region25: #{_lambda_.6} parent=11 // pred_check
        %p242 = pneg %p150
      $region26: #{_lambda_.6} parent=11 // pred_check_branch
        %244 = sbr.rel (%p242) target = $region28
      $region27: #{_lambda_.6} parent=11 // pred_region
        _
      $region28: #{_lambda_.6} parent=11 // pred_fallthru
        _
      // Predicated region
      $region29: #{_lambda_.6} parent=11 // pred_check
        %p245 = pneg %p171
      $region30: #{_lambda_.6} parent=11 // pred_check_branch
        %247 = sbr.rel (%p245) target = $region32
      $region31: #{_lambda_.6} parent=11 // pred_region
        _
      $region32: #{_lambda_.6} parent=11 // pred_fallthru
        _
      // Predicated region
      $region33: #{_lambda_.6} parent=11 // pred_check
        %p248 = pneg %p192
      $region34: #{_lambda_.6} parent=11 // pred_check_branch
        %250 = sbr.rel (%p248) target = $region36
      $region35: #{_lambda_.6} parent=11 // pred_region
        _
      $region36: #{_lambda_.6} parent=11 // pred_fallthru
        _
    $region12: #{_lambda_.6} parent=5 // pred_fallthru
      _
    %p251 = scmp.lt.s32.totalorder %s14, 2
    // Predicated region
    $region37: #{_lambda_.6} parent=5 // pred_check
      %p252 = pneg %p251
    $region38: #{_lambda_.6} parent=5 // pred_check_branch
      %254 = sbr.rel (%p252) target = $region40
    $region39: #{_lambda_.6} parent=5 // pred_region
      // Predicated region
      $region41: #{_lambda_.6} parent=39 // pred_check
        %p255 = pneg %p34
      $region42: #{_lambda_.6} parent=39 // pred_check_branch
        %257 = sbr.rel (%p255) target = $region44
      $region43: #{_lambda_.6} parent=39 // pred_region
        %p258 = scmp.lt.s32.totalorder %s14, 1
        %s259 = scalar_select %p258, %s14, 1
        %s260 = smul.addr %s259, 4
        %s261 = scalar_lea.vmem %s0, %s260
      $region44: #{_lambda_.6} parent=39 // pred_fallthru
        _
      // Predicated region
      $region45: #{_lambda_.6} parent=39 // pred_check
        %p262 = pneg %p60
      $region46: #{_lambda_.6} parent=39 // pred_check_branch
        %264 = sbr.rel (%p262) target = $region48
      $region47: #{_lambda_.6} parent=39 // pred_region
        %p265 = scmp.lt.s32.totalorder %s14, 1
        %s266 = scalar_select %p265, %s14, 1
        %s267 = scalar_lea.vmem %s1, %s266
      $region48: #{_lambda_.6} parent=39 // pred_fallthru
        _
    $region40: #{_lambda_.6} parent=5 // pred_fallthru
      _
    %p268 = scmp.le.s32.totalorder 1, %s14
    %p269 = scmp.lt.s32.totalorder %s14, 3
    %p270 = pnand %p268, %p269
    %p271 = pneg %p270
    // Predicated region
    $region49: #{_lambda_.6} parent=5 // pred_check
      _
    $region50: #{_lambda_.6} parent=5 // pred_check_branch
      %273 = sbr.rel (%p270) target = $region52
    $region51: #{_lambda_.6} parent=5 // pred_region
      %s274 = ssub.s32 %s14, 1
      %p275 = scmp.lt.s32.totalorder %s19, 1
      %s276 = scalar_select %p275, %s19, 1
      %s277 = smul.addr %s276, 4
      %s278 = scalar_lea.vmem %s0, %s277
      %p279 = pneg %p40
      %p280 = pneg %p37
      %p281 = scmp.lt.s32.totalorder %s19, 1
      %s282 = scalar_select %p281, %s19, 1
      %s283 = scalar_lea.vmem %s1, %s282
      %p284 = pneg %p66
      %p285 = pneg %p63
      %p286 = pneg %p87
      %p287 = pneg %p84
      %p288 = pneg %p108
      %p289 = pneg %p105
      %p290 = pneg %p129
      %p291 = pneg %p126
      %p292 = pneg %p150
      %p293 = pneg %p147
      %p294 = pneg %p171
      %p295 = pneg %p168
      %p296 = pneg %p192
      %p297 = pneg %p189
      %p298 = pneg %p218
      %p299 = pneg %p215
      %p300 = scmp.lt.s32.totalorder %s19, 1
      %s301 = scalar_select %p300, %s19, 1
      %s302 = smul.addr %s301, 4
      %s303 = scalar_lea.vmem %s8, %s302
      %p304 = scmp.lt.s32.totalorder %s19, 1
      %s305 = scalar_select %p304, %s19, 1
      %s306 = smul.addr %s305, 4
      %s307 = scalar_lea.vmem %s0, %s306
      %p308 = scmp.lt.s32.totalorder %s19, 1
      %s309 = scalar_select %p308, %s19, 1
      %s310 = scalar_lea.vmem %s1, %s309
      %p311 = scmp.lt.s32.totalorder %s19, 1
      %s312 = scalar_select %p311, %s19, 1
      %s313 = smul.addr %s312, 4
      %s314 = scalar_lea.vmem %s8, %s313
      %v316 = vld [vmem:[%s307] sm:$0xf]
      %v317 = vld [vmem:[%s2] sm:$0xf]
      %v318 = vld [vmem:[%s2 + $0x4] sm:$0xf]
      %v319 = vld [vmem:[%s2 + $0x8] sm:$0xf]
      %v320 = vld [vmem:[%s2 + $0xc] sm:$0xf]
      %v321 = vld [vmem:[%s3] sm:$0x1]
      %v323 = vlaneseq
      %v324 = vshrl.u32 %v323, 7
      %v325 = vsub.s32 0, %v324
      %v326 = vrot.slane %v321, %v325
      %v332 = vunpack.c.l.b16 %v317
      %v333 = vunpack.c.l.b16 %v318
      %v334 = vunpack.c.l.b16 %v319
      %v335 = vunpack.c.l.b16 %v320
      %v336 = vpack.c.b16 %v333, %v332
      %v337 = vpack.c.b16 %v335, %v334
      %vm340 = vcmask 261120
      %v342 = vsel %vm340, %v316, 0
      %344 = vmatprep.subr.bf16.mxu0 0
      %345 = vmatpush1.bf16.msra.mxu0 0
      %346 = vmatprep.subr.bf16.mxu0 0
      %347 = vmatpush1.bf16.msra.mxu0 0
      %348 = vmatprep.subr.bf16.mxu0 0
      %349 = vmatpush1.bf16.msra.mxu0 0
      %350 = vmatprep.subr.bf16.mxu0 0
      %351 = vmatpush1.bf16.msra.mxu0 0
      %352 = vmatprep.subr.bf16.mxu0 0
      %353 = vmatpush1.bf16.msra.mxu0 0
      %354 = vmatprep.subr.bf16.mxu0 0
      %355 = vmatpush1.bf16.msra.mxu0 0
      %356 = vmatprep.subr.bf16.mxu0 0
      %357 = vmatpush1.bf16.msra.mxu0 %v337
      %358 = vmatprep.subr.bf16.mxu0 0
      %359 = vmatpush1.bf16.msra.mxu0 %v336
      %360 = vmatprep.subr.bf16.mxu0 0
      %361 = vmatpush2.bf16.msra.mxu0 0
      %362 = vmatprep.subr.bf16.mxu0 0
      %363 = vmatpush2.bf16.msra.mxu0 0
      %364 = vmatprep.subr.bf16.mxu0 0
      %365 = vmatpush2.bf16.msra.mxu0 0
      %366 = vmatprep.subr.bf16.mxu0 0
      %367 = vmatpush2.bf16.msra.mxu0 0
      %368 = vmatprep.subr.bf16.mxu0 0
      %369 = vmatpush2.bf16.msra.mxu0 0
      %370 = vmatprep.subr.bf16.mxu0 0
      %371 = vmatpush2.bf16.msra.mxu0 0
      %372 = vmatprep.subr.bf16.mxu0 0
      %373 = vmatpush2.bf16.msra.mxu0 0
      %374 = vmatprep.subr.bf16.mxu0 0
      %375 = vmatpush2.bf16.msra.mxu0 0
      %376 = vmatprep.mubr.bf16.mxu0 0
      %377 = vmatmul.mubr.bf16.gmra.mxu0 %v342
      %v378 = vpop.f32.mrf.mxu0
      %v379 = vadd.f32 %v326, %v378
      %v380 = vpop.f32.mrf.mxu0
      %v381 = vpop.f32.mrf.mxu0
      %v382 = vpop.f32.mrf.mxu0
      %383 = vdwg.mxu0
      %v384 = vpack.c.bf16 %v379, %v379
      %v385 = vld [vmem:[%s310] sm:$0x1]
      %v387 = vlaneseq
      %v388 = vshrl.u32 %v387, 7
      %v389 = vsub.s32 0, %v388
      %v390 = vrot.slane %v385, %v389
      %393 = vrot.lane.b32.xlu0 %v384, 96
      %v394 = vpop.permute.xlu0 %393
      %vm395 = vcmask 64512
      %v397 = vsel %vm395, %v384, 0
      %v400 = vsel %vm395, %v394, 0
      %402 = vmatprep.subr.bf16.mxu0 0
      %403 = vmatpush1.bf16.xpose.msra.mxu0 0
      %404 = vmatprep.subr.bf16.mxu0 0
      %405 = vmatpush1.bf16.xpose.msra.mxu0 0
      %406 = vmatprep.subr.bf16.mxu0 0
      %407 = vmatpush1.bf16.xpose.msra.mxu0 0
      %408 = vmatprep.subr.bf16.mxu0 0
      %409 = vmatpush1.bf16.xpose.msra.mxu0 0
      %410 = vmatprep.subr.bf16.mxu0 0
      %411 = vmatpush1.bf16.xpose.msra.mxu0 0
      %412 = vmatprep.subr.bf16.mxu0 0
      %413 = vmatpush1.bf16.xpose.msra.mxu0 0
      %414 = vmatprep.subr.bf16.mxu0 0
      %415 = vmatpush1.bf16.xpose.msra.mxu0 0
      %416 = vmatprep.subr.bf16.mxu0 0
      %417 = vmatpush1.bf16.xpose.msra.mxu0 %v400
      %418 = vmatprep.subr.bf16.mxu0 0
      %419 = vmatpush2.bf16.xpose.msra.mxu0 0
      %420 = vmatprep.subr.bf16.mxu0 0
      %421 = vmatpush2.bf16.xpose.msra.mxu0 0
      %422 = vmatprep.subr.bf16.mxu0 0
      %423 = vmatpush2.bf16.xpose.msra.mxu0 0
      %424 = vmatprep.subr.bf16.mxu0 0
      %425 = vmatpush2.bf16.xpose.msra.mxu0 0
      %426 = vmatprep.subr.bf16.mxu0 0
      %427 = vmatpush2.bf16.xpose.msra.mxu0 0
      %428 = vmatprep.subr.bf16.mxu0 0
      %429 = vmatpush2.bf16.xpose.msra.mxu0 0
      %430 = vmatprep.subr.bf16.mxu0 0
      %431 = vmatpush2.bf16.xpose.msra.mxu0 0
      %432 = vmatprep.subr.bf16.mxu0 0
      %433 = vmatpush2.bf16.xpose.msra.mxu0 0
      %434 = vmatprep.mubr.bf16.mxu0 0
      %435 = vmatmul.mubr.bf16.gmra.mxu0 %v397
      %v436 = vpop.f32.mrf.mxu0
      %v437 = vadd.f32 %v390, %v436
      %v438 = vpop.f32.mrf.mxu0
      %v439 = vpop.f32.mrf.mxu0
      %v440 = vpop.f32.mrf.mxu0
      %441 = vdwg.mxu0
      %v442 = vsel %vm395, %v437, -inf
      %443 = vmax.xlane.f32.xlu0 %v442
      %v444 = vpop.xlane.xlu0 %443
      %v445 = vsub.f32 %v437, %v444
      %v446 = vmul.f32 %v445, 1.442695
      %v447 = vpow.pop %v446
      %v448 = vsel %vm395, %v447, 0.0
      %449 = vadd.xlane.f32.xlu0 %v448
      %v450 = vpop.xlane.xlu0 %449
      %v451 = vrcp.pop %v450
      %v452 = vpack.c.bf16 %v447, %v447
      %453 = vrot.lane.b32.xlu0 %v384, 64
      %v454 = vpop.permute.xlu0 %453
      %v456 = vsel %vm395, %v452, 0
      %vm458 = vcmask 1043456
      %v460 = vsel %vm458, %v454, 0
      %462 = vmatprep.subr.bf16.mxu0 0
      %463 = vmatpush1.bf16.msra.mxu0 0
      %464 = vmatprep.subr.bf16.mxu0 0
      %465 = vmatpush1.bf16.msra.mxu0 0
      %466 = vmatprep.subr.bf16.mxu0 0
      %467 = vmatpush1.bf16.msra.mxu0 0
      %468 = vmatprep.subr.bf16.mxu0 0
      %469 = vmatpush1.bf16.msra.mxu0 0
      %470 = vmatprep.subr.bf16.mxu0 0
      %471 = vmatpush1.bf16.msra.mxu0 0
      %472 = vmatprep.subr.bf16.mxu0 0
      %473 = vmatpush1.bf16.msra.mxu0 0
      %474 = vmatprep.subr.bf16.mxu0 0
      %475 = vmatpush1.bf16.msra.mxu0 0
      %476 = vmatprep.subr.bf16.mxu0 0
      %477 = vmatpush1.bf16.msra.mxu0 %v460
      %478 = vmatprep.subr.bf16.mxu0 0
      %479 = vmatpush2.bf16.msra.mxu0 0
      %480 = vmatprep.subr.bf16.mxu0 0
      %481 = vmatpush2.bf16.msra.mxu0 0
      %482 = vmatprep.subr.bf16.mxu0 0
      %483 = vmatpush2.bf16.msra.mxu0 0
      %484 = vmatprep.subr.bf16.mxu0 0
      %485 = vmatpush2.bf16.msra.mxu0 0
      %486 = vmatprep.subr.bf16.mxu0 0
      %487 = vmatpush2.bf16.msra.mxu0 0
      %488 = vmatprep.subr.bf16.mxu0 0
      %489 = vmatpush2.bf16.msra.mxu0 0
      %490 = vmatprep.subr.bf16.mxu0 0
      %491 = vmatpush2.bf16.msra.mxu0 0
      %492 = vmatprep.subr.bf16.mxu0 0
      %493 = vmatpush2.bf16.msra.mxu0 0
      %494 = vmatprep.mubr.bf16.mxu0 0
      %495 = vmatmul.mubr.bf16.gmra.mxu0 %v456
      %v496 = vpop.f32.mrf.mxu0
      %v497 = vadd.f32 0.0, %v496
      %v498 = vpop.f32.mrf.mxu0
      %v499 = vpop.f32.mrf.mxu0
      %v500 = vpop.f32.mrf.mxu0
      %501 = vdwg.mxu0
      %v502 = vmul.f32 %v497, %v451
      %503 = vrot.lane.b32.xlu0 %v384, 120
      %v504 = vpop.permute.xlu0 %503
      %505 = vrot.lane.b32.xlu0 %v384, 88
      %v506 = vpop.permute.xlu0 %505
      %v508 = vsel %vm395, %v504, 0
      %v511 = vsel %vm395, %v506, 0
      %513 = vmatprep.subr.bf16.mxu0 0
      %514 = vmatpush1.bf16.xpose.msra.mxu0 0
      %515 = vmatprep.subr.bf16.mxu0 0
      %516 = vmatpush1.bf16.xpose.msra.mxu0 0
      %517 = vmatprep.subr.bf16.mxu0 0
      %518 = vmatpush1.bf16.xpose.msra.mxu0 0
      %519 = vmatprep.subr.bf16.mxu0 0
      %520 = vmatpush1.bf16.xpose.msra.mxu0 0
      %521 = vmatprep.subr.bf16.mxu0 0
      %522 = vmatpush1.bf16.xpose.msra.mxu0 0
      %523 = vmatprep.subr.bf16.mxu0 0
      %524 = vmatpush1.bf16.xpose.msra.mxu0 0
      %525 = vmatprep.subr.bf16.mxu0 0
      %526 = vmatpush1.bf16.xpose.msra.mxu0 0
      %527 = vmatprep.subr.bf16.mxu0 0
      %528 = vmatpush1.bf16.xpose.msra.mxu0 %v511
      %529 = vmatprep.subr.bf16.mxu0 0
      %530 = vmatpush2.bf16.xpose.msra.mxu0 0
      %531 = vmatprep.subr.bf16.mxu0 0
      %532 = vmatpush2.bf16.xpose.msra.mxu0 0
      %533 = vmatprep.subr.bf16.mxu0 0
      %534 = vmatpush2.bf16.xpose.msra.mxu0 0
      %535 = vmatprep.subr.bf16.mxu0 0
      %536 = vmatpush2.bf16.xpose.msra.mxu0 0
      %537 = vmatprep.subr.bf16.mxu0 0
      %538 = vmatpush2.bf16.xpose.msra.mxu0 0
      %539 = vmatprep.subr.bf16.mxu0 0
      %540 = vmatpush2.bf16.xpose.msra.mxu0 0
      %541 = vmatprep.subr.bf16.mxu0 0
      %542 = vmatpush2.bf16.xpose.msra.mxu0 0
      %543 = vmatprep.subr.bf16.mxu0 0
      %544 = vmatpush2.bf16.xpose.msra.mxu0 0
      %545 = vmatprep.mubr.bf16.mxu0 0
      %546 = vmatmul.mubr.bf16.gmra.mxu0 %v508
      %v547 = vpop.f32.mrf.mxu0
      %v548 = vadd.f32 %v390, %v547
      %v549 = vpop.f32.mrf.mxu0
      %v550 = vpop.f32.mrf.mxu0
      %v551 = vpop.f32.mrf.mxu0
      %552 = vdwg.mxu0
      %v553 = vsel %vm395, %v548, -inf
      %554 = vmax.xlane.f32.xlu0 %v553
      %v555 = vpop.xlane.xlu0 %554
      %v556 = vsub.f32 %v548, %v555
      %v557 = vmul.f32 %v556, 1.442695
      %v558 = vpow.pop %v557
      %v559 = vsel %vm395, %v558, 0.0
      %560 = vadd.xlane.f32.xlu0 %v559
      %v561 = vpop.xlane.xlu0 %560
      %v562 = vrcp.pop %v561
      %v563 = vpack.c.bf16 %v558, %v558
      %564 = vrot.lane.b32.xlu0 %v384, 56
      %v565 = vpop.permute.xlu0 %564
      %v567 = vsel %vm395, %v563, 0
      %v570 = vsel %vm458, %v565, 0
      %572 = vmatprep.subr.bf16.mxu0 0
      %573 = vmatpush1.bf16.msra.mxu0 0
      %574 = vmatprep.subr.bf16.mxu0 0
      %575 = vmatpush1.bf16.msra.mxu0 0
      %576 = vmatprep.subr.bf16.mxu0 0
      %577 = vmatpush1.bf16.msra.mxu0 0
      %578 = vmatprep.subr.bf16.mxu0 0
      %579 = vmatpush1.bf16.msra.mxu0 0
      %580 = vmatprep.subr.bf16.mxu0 0
      %581 = vmatpush1.bf16.msra.mxu0 0
      %582 = vmatprep.subr.bf16.mxu0 0
      %583 = vmatpush1.bf16.msra.mxu0 0
      %584 = vmatprep.subr.bf16.mxu0 0
      %585 = vmatpush1.bf16.msra.mxu0 0
      %586 = vmatprep.subr.bf16.mxu0 0
      %587 = vmatpush1.bf16.msra.mxu0 %v570
      %588 = vmatprep.subr.bf16.mxu0 0
      %589 = vmatpush2.bf16.msra.mxu0 0
      %590 = vmatprep.subr.bf16.mxu0 0
      %591 = vmatpush2.bf16.msra.mxu0 0
      %592 = vmatprep.subr.bf16.mxu0 0
      %593 = vmatpush2.bf16.msra.mxu0 0
      %594 = vmatprep.subr.bf16.mxu0 0
      %595 = vmatpush2.bf16.msra.mxu0 0
      %596 = vmatprep.subr.bf16.mxu0 0
      %597 = vmatpush2.bf16.msra.mxu0 0
      %598 = vmatprep.subr.bf16.mxu0 0
      %599 = vmatpush2.bf16.msra.mxu0 0
      %600 = vmatprep.subr.bf16.mxu0 0
      %601 = vmatpush2.bf16.msra.mxu0 0
      %602 = vmatprep.subr.bf16.mxu0 0
      %603 = vmatpush2.bf16.msra.mxu0 0
      %604 = vmatprep.mubr.bf16.mxu0 0
      %605 = vmatmul.mubr.bf16.gmra.mxu0 %v567
      %v606 = vpop.f32.mrf.mxu0
      %v607 = vadd.f32 0.0, %v606
      %v608 = vpop.f32.mrf.mxu0
      %v609 = vpop.f32.mrf.mxu0
      %v610 = vpop.f32.mrf.mxu0
      %611 = vdwg.mxu0
      %v612 = vmul.f32 %v607, %v562
      %613 = vrot.lane.b32.xlu0 %v384, 112
      %v614 = vpop.permute.xlu0 %613
      %615 = vrot.lane.b32.xlu0 %v384, 80
      %v616 = vpop.permute.xlu0 %615
      %v618 = vsel %vm395, %v614, 0
      %v621 = vsel %vm395, %v616, 0
      %623 = vmatprep.subr.bf16.mxu0 0
      %624 = vmatpush1.bf16.xpose.msra.mxu0 0
      %625 = vmatprep.subr.bf16.mxu0 0
      %626 = vmatpush1.bf16.xpose.msra.mxu0 0
      %627 = vmatprep.subr.bf16.mxu0 0
      %628 = vmatpush1.bf16.xpose.msra.mxu0 0
      %629 = vmatprep.subr.bf16.mxu0 0
      %630 = vmatpush1.bf16.xpose.msra.mxu0 0
      %631 = vmatprep.subr.bf16.mxu0 0
      %632 = vmatpush1.bf16.xpose.msra.mxu0 0
      %633 = vmatprep.subr.bf16.mxu0 0
      %634 = vmatpush1.bf16.xpose.msra.mxu0 0
      %635 = vmatprep.subr.bf16.mxu0 0
      %636 = vmatpush1.bf16.xpose.msra.mxu0 0
      %637 = vmatprep.subr.bf16.mxu0 0
      %638 = vmatpush1.bf16.xpose.msra.mxu0 %v621
      %639 = vmatprep.subr.bf16.mxu0 0
      %640 = vmatpush2.bf16.xpose.msra.mxu0 0
      %641 = vmatprep.subr.bf16.mxu0 0
      %642 = vmatpush2.bf16.xpose.msra.mxu0 0
      %643 = vmatprep.subr.bf16.mxu0 0
      %644 = vmatpush2.bf16.xpose.msra.mxu0 0
      %645 = vmatprep.subr.bf16.mxu0 0
      %646 = vmatpush2.bf16.xpose.msra.mxu0 0
      %647 = vmatprep.subr.bf16.mxu0 0
      %648 = vmatpush2.bf16.xpose.msra.mxu0 0
      %649 = vmatprep.subr.bf16.mxu0 0
      %650 = vmatpush2.bf16.xpose.msra.mxu0 0
      %651 = vmatprep.subr.bf16.mxu0 0
      %652 = vmatpush2.bf16.xpose.msra.mxu0 0
      %653 = vmatprep.subr.bf16.mxu0 0
      %654 = vmatpush2.bf16.xpose.msra.mxu0 0
      %655 = vmatprep.mubr.bf16.mxu0 0
      %656 = vmatmul.mubr.bf16.gmra.mxu0 %v618
      %v657 = vpop.f32.mrf.mxu0
      %v658 = vadd.f32 %v390, %v657
      %v659 = vpop.f32.mrf.mxu0
      %v660 = vpop.f32.mrf.mxu0
      %v661 = vpop.f32.mrf.mxu0
      %662 = vdwg.mxu0
      %v663 = vsel %vm395, %v658, -inf
      %664 = vmax.xlane.f32.xlu0 %v663
      %v665 = vpop.xlane.xlu0 %664
      %v666 = vsub.f32 %v658, %v665
      %v667 = vmul.f32 %v666, 1.442695
      %v668 = vpow.pop %v667
      %v669 = vsel %vm395, %v668, 0.0
      %670 = vadd.xlane.f32.xlu0 %v669
      %v671 = vpop.xlane.xlu0 %670
      %v672 = vrcp.pop %v671
      %v673 = vpack.c.bf16 %v668, %v668
      %674 = vrot.lane.b32.xlu0 %v384, 48
      %v675 = vpop.permute.xlu0 %674
      %v677 = vsel %vm395, %v673, 0
      %v680 = vsel %vm458, %v675, 0
      %682 = vmatprep.subr.bf16.mxu0 0
      %683 = vmatpush1.bf16.msra.mxu0 0
      %684 = vmatprep.subr.bf16.mxu0 0
      %685 = vmatpush1.bf16.msra.mxu0 0
      %686 = vmatprep.subr.bf16.mxu0 0
      %687 = vmatpush1.bf16.msra.mxu0 0
      %688 = vmatprep.subr.bf16.mxu0 0
      %689 = vmatpush1.bf16.msra.mxu0 0
      %690 = vmatprep.subr.bf16.mxu0 0
      %691 = vmatpush1.bf16.msra.mxu0 0
      %692 = vmatprep.subr.bf16.mxu0 0
      %693 = vmatpush1.bf16.msra.mxu0 0
      %694 = vmatprep.subr.bf16.mxu0 0
      %695 = vmatpush1.bf16.msra.mxu0 0
      %696 = vmatprep.subr.bf16.mxu0 0
      %697 = vmatpush1.bf16.msra.mxu0 %v680
      %698 = vmatprep.subr.bf16.mxu0 0
      %699 = vmatpush2.bf16.msra.mxu0 0
      %700 = vmatprep.subr.bf16.mxu0 0
      %701 = vmatpush2.bf16.msra.mxu0 0
      %702 = vmatprep.subr.bf16.mxu0 0
      %703 = vmatpush2.bf16.msra.mxu0 0
      %704 = vmatprep.subr.bf16.mxu0 0
      %705 = vmatpush2.bf16.msra.mxu0 0
      %706 = vmatprep.subr.bf16.mxu0 0
      %707 = vmatpush2.bf16.msra.mxu0 0
      %708 = vmatprep.subr.bf16.mxu0 0
      %709 = vmatpush2.bf16.msra.mxu0 0
      %710 = vmatprep.subr.bf16.mxu0 0
      %711 = vmatpush2.bf16.msra.mxu0 0
      %712 = vmatprep.subr.bf16.mxu0 0
      %713 = vmatpush2.bf16.msra.mxu0 0
      %714 = vmatprep.mubr.bf16.mxu0 0
      %715 = vmatmul.mubr.bf16.gmra.mxu0 %v677
      %v716 = vpop.f32.mrf.mxu0
      %v717 = vadd.f32 0.0, %v716
      %v718 = vpop.f32.mrf.mxu0
      %v719 = vpop.f32.mrf.mxu0
      %v720 = vpop.f32.mrf.mxu0
      %721 = vdwg.mxu0
      %v722 = vmul.f32 %v717, %v672
      %723 = vrot.lane.b32.xlu0 %v384, 104
      %v724 = vpop.permute.xlu0 %723
      %725 = vrot.lane.b32.xlu0 %v384, 72
      %v726 = vpop.permute.xlu0 %725
      %v728 = vsel %vm395, %v724, 0
      %v731 = vsel %vm395, %v726, 0
      %733 = vmatprep.subr.bf16.mxu0 0
      %734 = vmatpush1.bf16.xpose.msra.mxu0 0
      %735 = vmatprep.subr.bf16.mxu0 0
      %736 = vmatpush1.bf16.xpose.msra.mxu0 0
      %737 = vmatprep.subr.bf16.mxu0 0
      %738 = vmatpush1.bf16.xpose.msra.mxu0 0
      %739 = vmatprep.subr.bf16.mxu0 0
      %740 = vmatpush1.bf16.xpose.msra.mxu0 0
      %741 = vmatprep.subr.bf16.mxu0 0
      %742 = vmatpush1.bf16.xpose.msra.mxu0 0
      %743 = vmatprep.subr.bf16.mxu0 0
      %744 = vmatpush1.bf16.xpose.msra.mxu0 0
      %745 = vmatprep.subr.bf16.mxu0 0
      %746 = vmatpush1.bf16.xpose.msra.mxu0 0
      %747 = vmatprep.subr.bf16.mxu0 0
      %748 = vmatpush1.bf16.xpose.msra.mxu0 %v731
      %749 = vmatprep.subr.bf16.mxu0 0
      %750 = vmatpush2.bf16.xpose.msra.mxu0 0
      %751 = vmatprep.subr.bf16.mxu0 0
      %752 = vmatpush2.bf16.xpose.msra.mxu0 0
      %753 = vmatprep.subr.bf16.mxu0 0
      %754 = vmatpush2.bf16.xpose.msra.mxu0 0
      %755 = vmatprep.subr.bf16.mxu0 0
      %756 = vmatpush2.bf16.xpose.msra.mxu0 0
      %757 = vmatprep.subr.bf16.mxu0 0
      %758 = vmatpush2.bf16.xpose.msra.mxu0 0
      %759 = vmatprep.subr.bf16.mxu0 0
      %760 = vmatpush2.bf16.xpose.msra.mxu0 0
      %761 = vmatprep.subr.bf16.mxu0 0
      %762 = vmatpush2.bf16.xpose.msra.mxu0 0
      %763 = vmatprep.subr.bf16.mxu0 0
      %764 = vmatpush2.bf16.xpose.msra.mxu0 0
      %765 = vmatprep.mubr.bf16.mxu0 0
      %766 = vmatmul.mubr.bf16.gmra.mxu0 %v728
      %v767 = vpop.f32.mrf.mxu0
      %v768 = vadd.f32 %v390, %v767
      %v769 = vpop.f32.mrf.mxu0
      %v770 = vpop.f32.mrf.mxu0
      %v771 = vpop.f32.mrf.mxu0
      %772 = vdwg.mxu0
      %v773 = vsel %vm395, %v768, -inf
      %774 = vmax.xlane.f32.xlu0 %v773
      %v775 = vpop.xlane.xlu0 %774
      %v776 = vsub.f32 %v768, %v775
      %v777 = vmul.f32 %v776, 1.442695
      %v778 = vpow.pop %v777
      %v779 = vsel %vm395, %v778, 0.0
      %780 = vadd.xlane.f32.xlu0 %v779
      %v781 = vpop.xlane.xlu0 %780
      %v782 = vrcp.pop %v781
      %v783 = vpack.c.bf16 %v778, %v778
      %784 = vrot.lane.b32.xlu0 %v384, 40
      %v785 = vpop.permute.xlu0 %784
      %v787 = vsel %vm395, %v783, 0
      %v790 = vsel %vm458, %v785, 0
      %792 = vmatprep.subr.bf16.mxu0 0
      %793 = vmatpush1.bf16.msra.mxu0 0
      %794 = vmatprep.subr.bf16.mxu0 0
      %795 = vmatpush1.bf16.msra.mxu0 0
      %796 = vmatprep.subr.bf16.mxu0 0
      %797 = vmatpush1.bf16.msra.mxu0 0
      %798 = vmatprep.subr.bf16.mxu0 0
      %799 = vmatpush1.bf16.msra.mxu0 0
      %800 = vmatprep.subr.bf16.mxu0 0
      %801 = vmatpush1.bf16.msra.mxu0 0
      %802 = vmatprep.subr.bf16.mxu0 0
      %803 = vmatpush1.bf16.msra.mxu0 0
      %804 = vmatprep.subr.bf16.mxu0 0
      %805 = vmatpush1.bf16.msra.mxu0 0
      %806 = vmatprep.subr.bf16.mxu0 0
      %807 = vmatpush1.bf16.msra.mxu0 %v790
      %808 = vmatprep.subr.bf16.mxu0 0
      %809 = vmatpush2.bf16.msra.mxu0 0
      %810 = vmatprep.subr.bf16.mxu0 0
      %811 = vmatpush2.bf16.msra.mxu0 0
      %812 = vmatprep.subr.bf16.mxu0 0
      %813 = vmatpush2.bf16.msra.mxu0 0
      %814 = vmatprep.subr.bf16.mxu0 0
      %815 = vmatpush2.bf16.msra.mxu0 0
      %816 = vmatprep.subr.bf16.mxu0 0
      %817 = vmatpush2.bf16.msra.mxu0 0
      %818 = vmatprep.subr.bf16.mxu0 0
      %819 = vmatpush2.bf16.msra.mxu0 0
      %820 = vmatprep.subr.bf16.mxu0 0
      %821 = vmatpush2.bf16.msra.mxu0 0
      %822 = vmatprep.subr.bf16.mxu0 0
      %823 = vmatpush2.bf16.msra.mxu0 0
      %824 = vmatprep.mubr.bf16.mxu0 0
      %825 = vmatmul.mubr.bf16.gmra.mxu0 %v787
      %v826 = vpop.f32.mrf.mxu0
      %v827 = vadd.f32 0.0, %v826
      %v828 = vpop.f32.mrf.mxu0
      %v829 = vpop.f32.mrf.mxu0
      %v830 = vpop.f32.mrf.mxu0
      %831 = vdwg.mxu0
      %v832 = vmul.f32 %v827, %v782
      %834 = vrot.lane.b32.xlu0 %v612, 8
      %v835 = vpop.permute.xlu0 %834
      %838 = vrot.lane.b32.xlu0 %v722, 16
      %v839 = vpop.permute.xlu0 %838
      %842 = vrot.lane.b32.xlu0 %v832, 24
      %v843 = vpop.permute.xlu0 %842
      %v845 = vsel %vm395, %v502, %v835
      %vm846 = vcmask 130048
      %v847 = vsel %vm846, %v845, %v839
      %vm848 = vcmask 195584
      %v849 = vsel %vm848, %v847, %v843
      %v850 = vpack.c.bf16 %v849, %v849
      %v851 = vld [vmem:[%s4] sm:$0xf]
      %v852 = vld [vmem:[%s4 + $0x4] sm:$0xf]
      %v853 = vld [vmem:[%s4 + $0x8] sm:$0xf]
      %v854 = vld [vmem:[%s4 + $0xc] sm:$0xf]
      %v855 = vld [vmem:[%s5] sm:$0x1]
      %v857 = vlaneseq
      %v858 = vshrl.u32 %v857, 7
      %v859 = vsub.s32 0, %v858
      %v860 = vrot.slane %v855, %v859
      %v866 = vunpack.c.l.b16 %v851
      %v867 = vunpack.c.l.b16 %v852
      %v868 = vunpack.c.l.b16 %v853
      %v869 = vunpack.c.l.b16 %v854
      %v870 = vpack.c.b16 %v867, %v866
      %v871 = vpack.c.b16 %v869, %v868
      %v875 = vsel %vm340, %v850, 0
      %877 = vmatprep.subr.bf16.mxu0 0
      %878 = vmatpush1.bf16.msra.mxu0 0
      %879 = vmatprep.subr.bf16.mxu0 0
      %880 = vmatpush1.bf16.msra.mxu0 0
      %881 = vmatprep.subr.bf16.mxu0 0
      %882 = vmatpush1.bf16.msra.mxu0 0
      %883 = vmatprep.subr.bf16.mxu0 0
      %884 = vmatpush1.bf16.msra.mxu0 0
      %885 = vmatprep.subr.bf16.mxu0 0
      %886 = vmatpush1.bf16.msra.mxu0 0
      %887 = vmatprep.subr.bf16.mxu0 0
      %888 = vmatpush1.bf16.msra.mxu0 0
      %889 = vmatprep.subr.bf16.mxu0 0
      %890 = vmatpush1.bf16.msra.mxu0 %v871
      %891 = vmatprep.subr.bf16.mxu0 0
      %892 = vmatpush1.bf16.msra.mxu0 %v870
      %893 = vmatprep.subr.bf16.mxu0 0
      %894 = vmatpush2.bf16.msra.mxu0 0
      %895 = vmatprep.subr.bf16.mxu0 0
      %896 = vmatpush2.bf16.msra.mxu0 0
      %897 = vmatprep.subr.bf16.mxu0 0
      %898 = vmatpush2.bf16.msra.mxu0 0
      %899 = vmatprep.subr.bf16.mxu0 0
      %900 = vmatpush2.bf16.msra.mxu0 0
      %901 = vmatprep.subr.bf16.mxu0 0
      %902 = vmatpush2.bf16.msra.mxu0 0
      %903 = vmatprep.subr.bf16.mxu0 0
      %904 = vmatpush2.bf16.msra.mxu0 0
      %905 = vmatprep.subr.bf16.mxu0 0
      %906 = vmatpush2.bf16.msra.mxu0 0
      %907 = vmatprep.subr.bf16.mxu0 0
      %908 = vmatpush2.bf16.msra.mxu0 0
      %909 = vmatprep.mubr.bf16.mxu0 0
      %910 = vmatmul.mubr.bf16.gmra.mxu0 %v875
      %v911 = vpop.f32.mrf.mxu0
      %v912 = vadd.f32 %v860, %v911
      %v913 = vpop.f32.mrf.mxu0
      %v914 = vpop.f32.mrf.mxu0
      %v915 = vpop.f32.mrf.mxu0
      %916 = vdwg.mxu0
      %v917 = vunpack.c.l.bf16 %v316
      %v918 = vadd.f32 %v912, %v917
      %v919 = vsel %vm340, %v918, 0.0
      %920 = vadd.xlane.f32.xlu0 %v919
      %v921 = vpop.xlane.xlu0 %920
      %v922 = vrcp.pop 32.0
      %v923 = vmul.f32 %v921, %v922
      %v924 = vsub.f32 %v918, %v923
      %v925 = vmul.f32 %v924, %v924
      %v926 = vsel %vm340, %v925, 0.0
      %927 = vadd.xlane.f32.xlu0 %v926
      %v928 = vpop.xlane.xlu0 %927
      %v929 = vmul.f32 %v928, %v922
      %v930 = vadd.f32 %v929, 1e-05
      %v931 = vrsqrt.pop %v930
      %v932 = vmul.f32 %v924, %v931
      %v933 = vld [vmem:[%s6] sm:$0x1]
      %v935 = vlaneseq
      %v936 = vshrl.u32 %v935, 7
      %v937 = vsub.s32 0, %v936
      %v938 = vrot.slane %v933, %v937
      %v940 = vmul.f32 %v932, %v938
      %v941 = vld [vmem:[%s7] sm:$0x1]
      %v943 = vlaneseq
      %v944 = vshrl.u32 %v943, 7
      %v945 = vsub.s32 0, %v944
      %v946 = vrot.slane %v941, %v945
      %v948 = vadd.f32 %v940, %v946
      %v949 = vpack.c.bf16 %v948, %v948
      %vm950 = vcmask 257024
      %951 = vst.msk [vmem:[%s314] sm:$0xf] %vm950, %v949
      %p952 = scmp.lt.s32.totalorder %s19, 1
      %s953 = scalar_select %p952, %s19, 1
      %s954 = smul.addr %s953, 4
      %s955 = scalar_lea.vmem %s8, %s954
      // Predicated region
      $region53: #{_lambda_.6} parent=51 // pred_check
        %p956 = pneg %p215
      $region54: #{_lambda_.6} parent=51 // pred_check_branch
        %958 = sbr.rel (%p956) target = $region56
      $region55: #{_lambda_.6} parent=51 // pred_region
        _
      $region56: #{_lambda_.6} parent=51 // pred_fallthru
        _
    $region52: #{_lambda_.6} parent=5 // pred_fallthru
      _
    %p959 = scmp.le.s32.totalorder 2, %s14
    // Predicated region
    $region57: #{_lambda_.6} parent=5 // pred_check
      %p960 = pneg %p959
    $region58: #{_lambda_.6} parent=5 // pred_check_branch
      %962 = sbr.rel (%p960) target = $region60
    $region59: #{_lambda_.6} parent=5 // pred_region
      %s963 = ssub.s32 %s14, 2
      // Predicated region
      $region61: #{_lambda_.6} parent=59 // pred_check
        %p964 = pneg %p221
      $region62: #{_lambda_.6} parent=59 // pred_check_branch
        %966 = sbr.rel (%p964) target = $region64
      $region63: #{_lambda_.6} parent=59 // pred_region
        %p967 = scmp.lt.s32.totalorder %s20, 1
        %s968 = scalar_select %p967, %s20, 1
        %s969 = smul.addr %s968, 4
        %s970 = scalar_lea.vmem %s8, %s969
      $region64: #{_lambda_.6} parent=59 // pred_fallthru
        _
    $region60: #{_lambda_.6} parent=5 // pred_fallthru
      _
  $region6: #{_lambda_.6} parent=0 // loop_footer
    %s18 = sadd.s32 1, %s14
  $region7: #{_lambda_.6} parent=0 // loop_footer_branch
    %13 = sbr.rel target = $region3
  $region8: #{_lambda_.6} parent=0 // loop_exit
    _

</llo_original>
